<compile_context>
chip_gen: v5e
topology: v5e:2x2
jax: 0.10.0
libtpu: 0.0.40
codegen_flags: <defaults>
</compile_context>

<pallas_src>
import functools

import numpy as np
import jax
import jax.numpy as jnp
from jax.experimental import pallas as pl

# ----------------------------- configuration --------------------------------
FEAT_DIM = 128          # stand-in for resnet50 fc.in_features (=2048)
SIZE_FEATURES = 64      # stand-in for size_features (=1024)
NB_CLASSES = 4
BN_EPS = 1e-5
CONV_K = 49             # 7x7 taps, single (summed) channel


# ------------------------------ Pallas kernel --------------------------------

def _fused_kernel(bs, n_sites, hw,
                  p_ref, wc_ref, wp_ref, g_ref,
                  w1_ref, c1_ref, w2_ref, c2_ref, o_ref):
    """conv1 (im2col matmul) + ReLU + GAP + projection + 3-group mean + head.

    p_ref : (B*hw, 49)   bf16  im2col patches (B = bs * n_sites images)
    wc_ref: (49, 64)     bf16  channel-mean conv1 weight (K unpadded)
    wp_ref: (64, FEAT)   bf16  stand-in projection (ResNet tail stand-in)
    g_ref : (3, bs, B)   f32   constant group-averaging matrices
    w1_ref: (3*FEAT, SIZE) bf16, c1_ref: (1, SIZE) f32   [BN1 folded in]
    w2_ref: (SIZE, NB)     bf16, c2_ref: (1, NB)   f32   [BN2 folded in]
    o_ref : (bs, NB)     f32
    """
    B = bs * n_sites
    F = FEAT_DIM

    # conv1 as one MXU matmul; K = 49 (Mosaic masks/pads K internally).
    conv = jnp.dot(p_ref[...], wc_ref[...],
                   preferred_element_type=jnp.float32)            # (B*hw, 64)
    conv = jnp.maximum(conv, 0.0)                                 # ReLU, f32

    # Per-image global average pool on VPU/XLU (tile-aligned: hw % 8 == 0).
    pooled = jnp.mean(conv.reshape(B, hw, 64), axis=1)            # (B, 64) f32

    # TODO(synk): stand-in projection replacing resnet50 bn1/maxpool/layer1..4.
    feats = jnp.dot(pooled.astype(jnp.bfloat16), wp_ref[...],
                    preferred_element_type=jnp.float32)           # (B, F) f32

    # 3-group site means (images / negative ctrls / positive ctrls), exact f32.
    m0 = jnp.dot(g_ref[0], feats, preferred_element_type=jnp.float32)  # (bs,F)
    m1 = jnp.dot(g_ref[1], feats, preferred_element_type=jnp.float32)
    m2 = jnp.dot(g_ref[2], feats, preferred_element_type=jnp.float32)

    # concat([m0,m1,m2],1) @ W1 == m0 @ W1[:F] + m1 @ W1[F:2F] + m2 @ W1[2F:]
    h = (jnp.dot(m0.astype(jnp.bfloat16), w1_ref[0 * F:1 * F, :],
                 preferred_element_type=jnp.float32)
         + jnp.dot(m1.astype(jnp.bfloat16), w1_ref[1 * F:2 * F, :],
                   preferred_element_type=jnp.float32)
         + jnp.dot(m2.astype(jnp.bfloat16), w1_ref[2 * F:3 * F, :],
                   preferred_element_type=jnp.float32)
         + c1_ref[...])
    h = jnp.maximum(h, 0.0)                         # Dropout = identity (eval)

    o_ref[...] = jnp.dot(h.astype(jnp.bfloat16), w2_ref[...],
                         preferred_element_type=jnp.float32) + c2_ref[...]


def fused_forward_pallas(patches, params, G, bs, n_sites, hw):
    """One grid-less pallas_call: the entire (toy-sized) batch fits VMEM.

    For large batches: tile patch rows over a 'parallel' grid, accumulate the
    per-site feats in a VMEM scratch, and run this epilogue under
    pl.when(last step) with the axis marked 'arbitrary'.
    """
    B = bs * n_sites
    flops = 2 * (B * hw * CONV_K * 64           # conv1
                 + B * 64 * FEAT_DIM            # projection
                 + 3 * bs * B * FEAT_DIM        # group means
                 + 3 * bs * FEAT_DIM * SIZE_FEATURES   # head linear 1
                 + bs * SIZE_FEATURES * NB_CLASSES)    # head linear 2
    bytes_accessed = (patches.size * 2
                      + params["w_conv"].size * 2 + params["w_proj"].size * 2
                      + G.size * 4
                      + params["w1f"].size * 2 + params["c1f"].size * 4
                      + params["w2f"].size * 2 + params["c2f"].size * 4
                      + bs * NB_CLASSES * 4)
    kernel = functools.partial(_fused_kernel, bs, n_sites, hw)
    return pl.pallas_call(
        kernel,
        out_shape=jax.ShapeDtypeStruct((bs, NB_CLASSES), jnp.float32),
        cost_estimate=pl.CostEstimate(flops=flops, transcendentals=0,
                                      bytes_accessed=bytes_accessed),
    )(patches, params["w_conv"], params["w_proj"], G,
      params["w1f"], params["c1f"], params["w2f"], params["c2f"])


# ------------------------------- glue (JAX) ----------------------------------

def im2col_1ch(x, kh, kw, stride, pad):
    """x: (B, H, W) single channel -> patches (B*Ho*Wo, kh*kw), Ho, Wo."""
    B, H, W = x.shape
    Ho = (H + 2 * pad - kh) // stride + 1
    Wo = (W + 2 * pad - kw) // stride + 1
    xp = jnp.pad(x, ((0, 0), (pad, pad), (pad, pad)))
    cols = []
    for ki in range(kh):
        for kj in range(kw):
            cols.append(xp[:, ki:ki + stride * Ho:stride,
                           kj:kj + stride * Wo:stride])
    p = jnp.stack(cols, axis=-1)                     # (B, Ho, Wo, kh*kw)
    return p.reshape(B * Ho * Wo, kh * kw), Ho, Wo


def init_params(key):
    ks = jax.random.split(key, 10)

    # Synthetic "pretrained" resnet50 conv1 weight (64, 3, 7, 7).
    w3 = jax.random.normal(ks[0], (64, 3, 7, 7), jnp.float32) * 0.05
    # __init__ weight surgery: mean over in-channels, stacked 6x along dim 1
    # (no 1/6 scaling in the torch code).  Shortcut:
    #   conv(x_6ch, stack([w_mean]*6)) == conv(sum_c x_c, w_mean),
    # so only the (49, 64) mean kernel is stored — K left unpadded.
    w_mean = jnp.mean(w3, axis=1)                                # (64, 7, 7)
    w_conv = w_mean.reshape(64, CONV_K).T.astype(jnp.bfloat16)   # (49, 64)

    # TODO(synk): stand-in linear projection replacing resnet50 layer1..layer4.
    w_proj = (jax.random.normal(ks[1], (64, FEAT_DIM), jnp.float32)
              * 0.05).astype(jnp.bfloat16)

    d_in = 3 * FEAT_DIM
    # MLP head parameters (eval-mode BatchNorm running stats + Linear weights).
    bn1_g = jax.random.normal(ks[2], (d_in,), jnp.float32) * 0.1 + 1.0
    bn1_b = jax.random.normal(ks[3], (d_in,), jnp.float32) * 0.1
    bn1_m = jax.random.normal(ks[4], (d_in,), jnp.float32) * 0.1
    bn1_v = jax.random.uniform(ks[5], (d_in,), jnp.float32, 0.5, 1.5)
    w1 = jax.random.normal(ks[6], (d_in, SIZE_FEATURES), jnp.float32) * 0.05
    c1 = jax.random.normal(ks[7], (SIZE_FEATURES,), jnp.float32) * 0.05
    bn2_g = jnp.ones((SIZE_FEATURES,), jnp.float32)
    bn2_b = jnp.zeros((SIZE_FEATURES,), jnp.float32)
    bn2_m = jnp.zeros((SIZE_FEATURES,), jnp.float32)
    bn2_v = jnp.ones((SIZE_FEATURES,), jnp.float32)
    w2 = jax.random.normal(ks[8], (SIZE_FEATURES, NB_CLASSES), jnp.float32) * 0.05
    c2 = jax.random.normal(ks[9], (NB_CLASSES,), jnp.float32) * 0.05

    # Fold eval-mode BatchNorm into the Linear layers:
    #   BN(x) = x*s + t,  s = g/sqrt(v+eps),  t = b - m*s
    #   Linear(BN(x)) = x @ (diag(s) @ W) + (t @ W + c)
    s1 = bn1_g * jax.lax.rsqrt(bn1_v + BN_EPS)
    t1 = bn1_b - bn1_m * s1
    w1f = (w1 * s1[:, None]).astype(jnp.bfloat16)
    c1f = (c1 + t1 @ w1).reshape(1, SIZE_FEATURES)               # f32 bias
    s2 = bn2_g * jax.lax.rsqrt(bn2_v + BN_EPS)
    t2 = bn2_b - bn2_m * s2
    w2f = (w2 * s2[:, None]).astype(jnp.bfloat16)
    c2f = (c2 + t2 @ w2).reshape(1, NB_CLASSES)                  # f32 bias

    return {"w_conv": w_conv, "w_proj": w_proj,
            "w1f": w1f, "c1f": c1f, "w2f": w2f, "c2f": c2f}


def two_sites_forward(x, params):
    """x: (bs, n_sites, 6, H, W) with n_sites % 3 == 0."""
    bs, n_sites, C, H, W = x.shape
    assert n_sites % 3 == 0, "n_sites must split into 3 equal groups"
    B = bs * n_sites
    xb = x.reshape(B, C, H, W)

    # ---- conv1 (6-ch, 7x7, s2, p3, no bias): channel-sum + 1-channel im2col.
    x_sum = jnp.sum(xb, axis=1)                                  # (B, H, W)
    patches, Ho, Wo = im2col_1ch(x_sum, 7, 7, stride=2, pad=3)   # (B*HW, 49)
    hw = Ho * Wo
    assert hw % 8 == 0, "spatial output must be sublane-aligned for pooling"
    patches = patches.astype(jnp.bfloat16)                       # K unpadded

    # Constant 3-group site-averaging matrices (trace-time constant / folded).
    g = n_sites // 3
    g_np = np.zeros((3, bs, B), np.float32)
    for gi in range(3):
        for b in range(bs):
            g_np[gi, b, b * n_sites + gi * g: b * n_sites + (gi + 1) * g] = 1.0 / g
    G = jnp.asarray(g_np)

    # ---- single fused Pallas call: conv + ReLU + GAP + proj + group mean + MLP.
    return fused_forward_pallas(patches, params, G, bs, n_sites, hw)


# --------------------------------- main --------------------------------------

if __name__ == "__main__":
    key = jax.random.PRNGKey(0)
    k_x, k_p = jax.random.split(key)

    bs, n_sites, C, H, W = 2, 6, 6, 16, 16      # n_sites = 3 groups of 2
    x = jax.random.normal(k_x, (bs, n_sites, C, H, W), jnp.float32)
    params = init_params(k_p)

    fwd = jax.jit(two_sites_forward)
    out = jax.block_until_ready(fwd(x, params))

    assert out.shape == (bs, NB_CLASSES), out.shape
    assert bool(jnp.all(jnp.isfinite(out)))
    print("KERNEL_OK")
</pallas_src>

<mosaic_0001>
module attributes {stable_mosaic.version = 11 : i64} {
  func.func @_fused_kernel(%arg0: memref<768x49xbf16, #tpu.memory_space<vmem>>, %arg1: memref<49x64xbf16, #tpu.memory_space<vmem>>, %arg2: memref<64x128xbf16, #tpu.memory_space<vmem>>, %arg3: memref<3x2x12xf32, #tpu.memory_space<vmem>>, %arg4: memref<384x64xbf16, #tpu.memory_space<vmem>>, %arg5: memref<1x64xf32, #tpu.memory_space<vmem>>, %arg6: memref<64x4xbf16, #tpu.memory_space<vmem>>, %arg7: memref<1x4xf32, #tpu.memory_space<vmem>>, %arg8: memref<2x4xf32, #tpu.memory_space<vmem>>) attributes {dimension_semantics = [], scalar_prefetch = 0 : i64, scratch_operands = 0 : i64, tpu.core_type = #tpu.core_type<tc>} {
    %c0 = arith.constant 0 : index
    %c0_0 = arith.constant 0 : index
    %0 = vector.load %arg0[%c0, %c0_0] : memref<768x49xbf16, #tpu.memory_space<vmem>>, vector<768x49xbf16>
    %c0_1 = arith.constant 0 : index
    %c0_2 = arith.constant 0 : index
    %1 = vector.load %arg1[%c0_1, %c0_2] : memref<49x64xbf16, #tpu.memory_space<vmem>>, vector<49x64xbf16>
    %cst = arith.constant dense<0.000000e+00> : vector<768x64xf32>
    %2 = tpu.matmul %0, %1, %cst {dimension_numbers = #tpu.dot_dimension_numbers<[1], [0], [0], [1], [0, 0, 1, 1], [], []>} : vector<768x49xbf16>, vector<49x64xbf16>, vector<768x64xf32> -> vector<768x64xf32>
    %cst_3 = arith.constant 0.000000e+00 : f32
    %3 = vector.broadcast %cst_3 : f32 to vector<768x64xf32>
    %4 = arith.maximumf %2, %3 : vector<768x64xf32>
    %5 = vector.shape_cast %4 : vector<768x64xf32> to vector<12x64x64xf32>
    %cst_4 = arith.constant dense<0.000000e+00> : vector<12x64xf32>
    %6 = vector.multi_reduction <add>, %5, %cst_4 [1] : vector<12x64x64xf32> to vector<12x64xf32>
    %cst_5 = arith.constant 6.400000e+01 : f32
    %7 = vector.broadcast %cst_5 : f32 to vector<12x64xf32>
    %8 = arith.divf %6, %7 : vector<12x64xf32>
    %9 = arith.truncf %8 : vector<12x64xf32> to vector<12x64xbf16>
    %c0_6 = arith.constant 0 : index
    %c0_7 = arith.constant 0 : index
    %10 = vector.load %arg2[%c0_6, %c0_7] : memref<64x128xbf16, #tpu.memory_space<vmem>>, vector<64x128xbf16>
    %cst_8 = arith.constant dense<0.000000e+00> : vector<12x128xf32>
    %11 = tpu.matmul %9, %10, %cst_8 {dimension_numbers = #tpu.dot_dimension_numbers<[1], [0], [0], [1], [0, 0, 1, 1], [], []>} : vector<12x64xbf16>, vector<64x128xbf16>, vector<12x128xf32> -> vector<12x128xf32>
    %c0_9 = arith.constant 0 : index
    %c0_10 = arith.constant 0 : index
    %c0_11 = arith.constant 0 : index
    %12 = vector.load %arg3[%c0_9, %c0_10, %c0_11] : memref<3x2x12xf32, #tpu.memory_space<vmem>>, vector<1x2x12xf32>
    %13 = vector.shape_cast %12 : vector<1x2x12xf32> to vector<2x12xf32>
    %cst_12 = arith.constant dense<0.000000e+00> : vector<2x128xf32>
    %14 = tpu.matmul %13, %11, %cst_12 {dimension_numbers = #tpu.dot_dimension_numbers<[1], [0], [0], [1], [0, 0, 1, 1], [], []>} : vector<2x12xf32>, vector<12x128xf32>, vector<2x128xf32> -> vector<2x128xf32>
    %c1 = arith.constant 1 : index
    %c0_13 = arith.constant 0 : index
    %c0_14 = arith.constant 0 : index
    %15 = vector.load %arg3[%c1, %c0_13, %c0_14] : memref<3x2x12xf32, #tpu.memory_space<vmem>>, vector<1x2x12xf32>
    %16 = vector.shape_cast %15 : vector<1x2x12xf32> to vector<2x12xf32>
    %cst_15 = arith.constant dense<0.000000e+00> : vector<2x128xf32>
    %17 = tpu.matmul %16, %11, %cst_15 {dimension_numbers = #tpu.dot_dimension_numbers<[1], [0], [0], [1], [0, 0, 1, 1], [], []>} : vector<2x12xf32>, vector<12x128xf32>, vector<2x128xf32> -> vector<2x128xf32>
    %c2 = arith.constant 2 : index
    %c0_16 = arith.constant 0 : index
    %c0_17 = arith.constant 0 : index
    %18 = vector.load %arg3[%c2, %c0_16, %c0_17] : memref<3x2x12xf32, #tpu.memory_space<vmem>>, vector<1x2x12xf32>
    %19 = vector.shape_cast %18 : vector<1x2x12xf32> to vector<2x12xf32>
    %cst_18 = arith.constant dense<0.000000e+00> : vector<2x128xf32>
    %20 = tpu.matmul %19, %11, %cst_18 {dimension_numbers = #tpu.dot_dimension_numbers<[1], [0], [0], [1], [0, 0, 1, 1], [], []>} : vector<2x12xf32>, vector<12x128xf32>, vector<2x128xf32> -> vector<2x128xf32>
    %21 = arith.truncf %14 : vector<2x128xf32> to vector<2x128xbf16>
    %c0_19 = arith.constant 0 : index
    %c0_20 = arith.constant 0 : index
    %22 = vector.load %arg4[%c0_19, %c0_20] : memref<384x64xbf16, #tpu.memory_space<vmem>>, vector<128x64xbf16>
    %cst_21 = arith.constant dense<0.000000e+00> : vector<2x64xf32>
    %23 = tpu.matmul %21, %22, %cst_21 {dimension_numbers = #tpu.dot_dimension_numbers<[1], [0], [0], [1], [0, 0, 1, 1], [], []>} : vector<2x128xbf16>, vector<128x64xbf16>, vector<2x64xf32> -> vector<2x64xf32>
    %24 = arith.truncf %17 : vector<2x128xf32> to vector<2x128xbf16>
    %c128 = arith.constant 128 : index
    %c0_22 = arith.constant 0 : index
    %25 = vector.load %arg4[%c128, %c0_22] : memref<384x64xbf16, #tpu.memory_space<vmem>>, vector<128x64xbf16>
    %cst_23 = arith.constant dense<0.000000e+00> : vector<2x64xf32>
    %26 = tpu.matmul %24, %25, %cst_23 {dimension_numbers = #tpu.dot_dimension_numbers<[1], [0], [0], [1], [0, 0, 1, 1], [], []>} : vector<2x128xbf16>, vector<128x64xbf16>, vector<2x64xf32> -> vector<2x64xf32>
    %27 = arith.addf %23, %26 : vector<2x64xf32>
    %28 = arith.truncf %20 : vector<2x128xf32> to vector<2x128xbf16>
    %c256 = arith.constant 256 : index
    %c0_24 = arith.constant 0 : index
    %29 = vector.load %arg4[%c256, %c0_24] : memref<384x64xbf16, #tpu.memory_space<vmem>>, vector<128x64xbf16>
    %cst_25 = arith.constant dense<0.000000e+00> : vector<2x64xf32>
    %30 = tpu.matmul %28, %29, %cst_25 {dimension_numbers = #tpu.dot_dimension_numbers<[1], [0], [0], [1], [0, 0, 1, 1], [], []>} : vector<2x128xbf16>, vector<128x64xbf16>, vector<2x64xf32> -> vector<2x64xf32>
    %31 = arith.addf %27, %30 : vector<2x64xf32>
    %c0_26 = arith.constant 0 : index
    %c0_27 = arith.constant 0 : index
    %32 = vector.load %arg5[%c0_26, %c0_27] : memref<1x64xf32, #tpu.memory_space<vmem>>, vector<1x64xf32>
    %33 = vector.broadcast %32 : vector<1x64xf32> to vector<2x64xf32>
    %34 = arith.addf %31, %33 : vector<2x64xf32>
    %cst_28 = arith.constant 0.000000e+00 : f32
    %35 = vector.broadcast %cst_28 : f32 to vector<2x64xf32>
    %36 = arith.maximumf %34, %35 : vector<2x64xf32>
    %37 = arith.truncf %36 : vector<2x64xf32> to vector<2x64xbf16>
    %c0_29 = arith.constant 0 : index
    %c0_30 = arith.constant 0 : index
    %38 = vector.load %arg6[%c0_29, %c0_30] : memref<64x4xbf16, #tpu.memory_space<vmem>>, vector<64x4xbf16>
    %cst_31 = arith.constant dense<0.000000e+00> : vector<2x4xf32>
    %39 = tpu.matmul %37, %38, %cst_31 {dimension_numbers = #tpu.dot_dimension_numbers<[1], [0], [0], [1], [0, 0, 1, 1], [], []>} : vector<2x64xbf16>, vector<64x4xbf16>, vector<2x4xf32> -> vector<2x4xf32>
    %c0_32 = arith.constant 0 : index
    %c0_33 = arith.constant 0 : index
    %40 = vector.load %arg7[%c0_32, %c0_33] : memref<1x4xf32, #tpu.memory_space<vmem>>, vector<1x4xf32>
    %41 = vector.broadcast %40 : vector<1x4xf32> to vector<2x4xf32>
    %42 = arith.addf %39, %41 : vector<2x4xf32>
    %c0_34 = arith.constant 0 : index
    %c0_35 = arith.constant 0 : index
    %43 = vector.load %arg8[%c0_34, %c0_35] : memref<2x4xf32, #tpu.memory_space<vmem>>, vector<2x4xf32>
    tpu.vector_store %arg8[%c0_34, %c0_35], %42 {strides = array<i32>} : memref<2x4xf32, #tpu.memory_space<vmem>>, vector<2x4xf32>,
    return
  }
}

</mosaic_0001>

<llo_original>
// kernel: two_sites_forward.1
$region0: #{two_sites_forward.1}
  #allocation0 [shape = 'u32[]', space=smem, size = 0x4, offset = 0x4, fixed_abs, tag = 'smem constant byte address 0x4 - core index']
  #allocation1 [shape = 'u32[72,128]{1,0:T(1,128)}', space=vmem, size = 0x9000, scoped, tag = 'internal scratch']
  %s0 = inlined_call_operand.vmem [shape: bf16[768,49], index: 0, kind: input, shape index: {}]
  %s1 = inlined_call_operand.vmem [shape: bf16[49,64], index: 1, kind: input, shape index: {}]
  %s2 = inlined_call_operand.vmem [shape: bf16[64,128], index: 2, kind: input, shape index: {}]
  %s3 = inlined_call_operand.vmem [shape: f32[3,2,12], index: 3, kind: input, shape index: {}]
  %s4 = inlined_call_operand.vmem [shape: bf16[384,64], index: 4, kind: input, shape index: {}]
  %s5 = inlined_call_operand.vmem [shape: f32[1,64], index: 5, kind: input, shape index: {}]
  %s6 = inlined_call_operand.vmem [shape: bf16[64,4], index: 6, kind: input, shape index: {}]
  %s7 = inlined_call_operand.vmem [shape: f32[1,4], index: 7, kind: input, shape index: {}]
  %s8 = inlined_call_operand.hbm [shape: f32[2,4], index: 8, kind: output, shape index: {}]
  %s9 = sld [smem:[#allocation0]]
  $region42: #{two_sites_forward.1} parent=0
    _
  %s11 = ssub.s32 1, %s9
  %s12 = scalar_select 0, %s11, %s9
  $region1: #{two_sites_forward.1} parent=0
    #allocation2 [shape = 'u8[1024]{0}', space=vmem, size = 0x400, scoped, tag = 'output window, operand 0, single buffered']
    #allocation3 [shape = 's32[1]{0}', space=sflag, size = 0x4, scoped, tag = 'scoped memory for two_sites_forward.1']
    %13 = vsyncpa [#allocation3], 0
    // Predicated region
    $region2: #{two_sites_forward.1} parent=1 // pred_check
      _
    $region3: #{two_sites_forward.1} parent=1 // pred_check_branch
      %15 = sbr.rel (0) target = $region5
    $region4: #{two_sites_forward.1} parent=1 // pred_region
      _
    $region5: #{two_sites_forward.1} parent=1 // pred_fallthru
      _
    // Predicated region
    $region6: #{two_sites_forward.1} parent=1 // pred_check
      _
    $region7: #{two_sites_forward.1} parent=1 // pred_check_branch
      %17 = sbr.rel (0) target = $region9
    $region8: #{two_sites_forward.1} parent=1 // pred_region
      _
    $region9: #{two_sites_forward.1} parent=1 // pred_fallthru
      _
    // Predicated region
    $region10: #{two_sites_forward.1} parent=1 // pred_check
      _
    $region11: #{two_sites_forward.1} parent=1 // pred_check_branch
      %19 = sbr.rel (0) target = $region13
    $region12: #{two_sites_forward.1} parent=1 // pred_region
      _
    $region13: #{two_sites_forward.1} parent=1 // pred_fallthru
      _
    // Predicated region
    $region14: #{two_sites_forward.1} parent=1 // pred_check
      _
    $region15: #{two_sites_forward.1} parent=1 // pred_check_branch
      %21 = sbr.rel (0) target = $region17
    $region16: #{two_sites_forward.1} parent=1 // pred_region
      _
    $region17: #{two_sites_forward.1} parent=1 // pred_fallthru
      _
    // Predicated region
    $region18: #{two_sites_forward.1} parent=1 // pred_check
      _
    $region19: #{two_sites_forward.1} parent=1 // pred_check_branch
      %23 = sbr.rel (0) target = $region21
    $region20: #{two_sites_forward.1} parent=1 // pred_region
      _
    $region21: #{two_sites_forward.1} parent=1 // pred_fallthru
      _
    // Predicated region
    $region22: #{two_sites_forward.1} parent=1 // pred_check
      _
    $region23: #{two_sites_forward.1} parent=1 // pred_check_branch
      %25 = sbr.rel (0) target = $region25
    $region24: #{two_sites_forward.1} parent=1 // pred_region
      _
    $region25: #{two_sites_forward.1} parent=1 // pred_fallthru
      _
    // Predicated region
    $region26: #{two_sites_forward.1} parent=1 // pred_check
      _
    $region27: #{two_sites_forward.1} parent=1 // pred_check_branch
      %27 = sbr.rel (0) target = $region29
    $region28: #{two_sites_forward.1} parent=1 // pred_region
      _
    $region29: #{two_sites_forward.1} parent=1 // pred_fallthru
      _
    // Predicated region
    $region30: #{two_sites_forward.1} parent=1 // pred_check
      _
    $region31: #{two_sites_forward.1} parent=1 // pred_check_branch
      %29 = sbr.rel (0) target = $region33
    $region32: #{two_sites_forward.1} parent=1 // pred_region
      _
    $region33: #{two_sites_forward.1} parent=1 // pred_fallthru
      _
    %v31 = vld [vmem:[%s0] sm:$0xf]
    %v32 = vld [vmem:[%s0 + $0x4] sm:$0xf]
    %v33 = vld [vmem:[%s0 + $0x8] sm:$0xf]
    %v34 = vld [vmem:[%s0 + $0xc] sm:$0xf]
    %v35 = vld [vmem:[%s0 + $0x10] sm:$0xf]
    %v36 = vld [vmem:[%s0 + $0x14] sm:$0xf]
    %v37 = vld [vmem:[%s0 + $0x18] sm:$0xf]
    %v38 = vld [vmem:[%s0 + $0x1c] sm:$0xf]
    %v39 = vld [vmem:[%s0 + $0x20] sm:$0xf]
    %v40 = vld [vmem:[%s0 + $0x24] sm:$0xf]
    %v41 = vld [vmem:[%s0 + $0x28] sm:$0xf]
    %v42 = vld [vmem:[%s0 + $0x2c] sm:$0xf]
    %v43 = vld [vmem:[%s0 + $0x30] sm:$0xf]
    %v44 = vld [vmem:[%s0 + $0x34] sm:$0xf]
    %v45 = vld [vmem:[%s0 + $0x38] sm:$0xf]
    %v46 = vld [vmem:[%s0 + $0x3c] sm:$0xf]
    %v47 = vld [vmem:[%s0 + $0x40] sm:$0xf]
    %v48 = vld [vmem:[%s0 + $0x44] sm:$0xf]
    %v49 = vld [vmem:[%s0 + $0x48] sm:$0xf]
    %v50 = vld [vmem:[%s0 + $0x4c] sm:$0xf]
    %v51 = vld [vmem:[%s0 + $0x50] sm:$0xf]
    %v52 = vld [vmem:[%s0 + $0x54] sm:$0xf]
    %v53 = vld [vmem:[%s0 + $0x58] sm:$0xf]
    %v54 = vld [vmem:[%s0 + $0x5c] sm:$0xf]
    %v55 = vld [vmem:[%s0 + $0x60] sm:$0xf]
    %v56 = vld [vmem:[%s0 + $0x64] sm:$0xf]
    %v57 = vld [vmem:[%s0 + $0x68] sm:$0xf]
    %v58 = vld [vmem:[%s0 + $0x6c] sm:$0xf]
    %v59 = vld [vmem:[%s0 + $0x70] sm:$0xf]
    %v60 = vld [vmem:[%s0 + $0x74] sm:$0xf]
    %v61 = vld [vmem:[%s0 + $0x78] sm:$0xf]
    %v62 = vld [vmem:[%s0 + $0x7c] sm:$0xf]
    %v63 = vld [vmem:[%s0 + $0x80] sm:$0xf]
    %v64 = vld [vmem:[%s0 + $0x84] sm:$0xf]
    %v65 = vld [vmem:[%s0 + $0x88] sm:$0xf]
    %v66 = vld [vmem:[%s0 + $0x8c] sm:$0xf]
    %v67 = vld [vmem:[%s0 + $0x90] sm:$0xf]
    %v68 = vld [vmem:[%s0 + $0x94] sm:$0xf]
    %v69 = vld [vmem:[%s0 + $0x98] sm:$0xf]
    %v70 = vld [vmem:[%s0 + $0x9c] sm:$0xf]
    %v71 = vld [vmem:[%s0 + $0xa0] sm:$0xf]
    %v72 = vld [vmem:[%s0 + $0xa4] sm:$0xf]
    %v73 = vld [vmem:[%s0 + $0xa8] sm:$0xf]
    %v74 = vld [vmem:[%s0 + $0xac] sm:$0xf]
    %v75 = vld [vmem:[%s0 + $0xb0] sm:$0xf]
    %v76 = vld [vmem:[%s0 + $0xb4] sm:$0xf]
    %v77 = vld [vmem:[%s0 + $0xb8] sm:$0xf]
    %v78 = vld [vmem:[%s0 + $0xbc] sm:$0xf]
    %v79 = vld [vmem:[%s0 + $0xc0] sm:$0xf]
    %v80 = vld [vmem:[%s0 + $0xc4] sm:$0xf]
    %v81 = vld [vmem:[%s0 + $0xc8] sm:$0xf]
    %v82 = vld [vmem:[%s0 + $0xcc] sm:$0xf]
    %v83 = vld [vmem:[%s0 + $0xd0] sm:$0xf]
    %v84 = vld [vmem:[%s0 + $0xd4] sm:$0xf]
    %v85 = vld [vmem:[%s0 + $0xd8] sm:$0xf]
    %v86 = vld [vmem:[%s0 + $0xdc] sm:$0xf]
    %v87 = vld [vmem:[%s0 + $0xe0] sm:$0xf]
    %v88 = vld [vmem:[%s0 + $0xe4] sm:$0xf]
    %v89 = vld [vmem:[%s0 + $0xe8] sm:$0xf]
    %v90 = vld [vmem:[%s0 + $0xec] sm:$0xf]
    %v91 = vld [vmem:[%s0 + $0xf0] sm:$0xf]
    %v92 = vld [vmem:[%s0 + $0xf4] sm:$0xf]
    %v93 = vld [vmem:[%s0 + $0xf8] sm:$0xf]
    %v94 = vld [vmem:[%s0 + $0xfc] sm:$0xf]
    %v95 = vld [vmem:[%s0 + $0x100] sm:$0xf]
    %v96 = vld [vmem:[%s0 + $0x104] sm:$0xf]
    %v97 = vld [vmem:[%s0 + $0x108] sm:$0xf]
    %v98 = vld [vmem:[%s0 + $0x10c] sm:$0xf]
    %v99 = vld [vmem:[%s0 + $0x110] sm:$0xf]
    %v100 = vld [vmem:[%s0 + $0x114] sm:$0xf]
    %v101 = vld [vmem:[%s0 + $0x118] sm:$0xf]
    %v102 = vld [vmem:[%s0 + $0x11c] sm:$0xf]
    %v103 = vld [vmem:[%s0 + $0x120] sm:$0xf]
    %v104 = vld [vmem:[%s0 + $0x124] sm:$0xf]
    %v105 = vld [vmem:[%s0 + $0x128] sm:$0xf]
    %v106 = vld [vmem:[%s0 + $0x12c] sm:$0xf]
    %v107 = vld [vmem:[%s0 + $0x130] sm:$0xf]
    %v108 = vld [vmem:[%s0 + $0x134] sm:$0xf]
    %v109 = vld [vmem:[%s0 + $0x138] sm:$0xf]
    %v110 = vld [vmem:[%s0 + $0x13c] sm:$0xf]
    %v111 = vld [vmem:[%s0 + $0x140] sm:$0xf]
    %v112 = vld [vmem:[%s0 + $0x144] sm:$0xf]
    %v113 = vld [vmem:[%s0 + $0x148] sm:$0xf]
    %v114 = vld [vmem:[%s0 + $0x14c] sm:$0xf]
    %v115 = vld [vmem:[%s0 + $0x150] sm:$0xf]
    %v116 = vld [vmem:[%s0 + $0x154] sm:$0xf]
    %v117 = vld [vmem:[%s0 + $0x158] sm:$0xf]
    %v118 = vld [vmem:[%s0 + $0x15c] sm:$0xf]
    %v119 = vld [vmem:[%s0 + $0x160] sm:$0xf]
    %v120 = vld [vmem:[%s0 + $0x164] sm:$0xf]
    %v121 = vld [vmem:[%s0 + $0x168] sm:$0xf]
    %v122 = vld [vmem:[%s0 + $0x16c] sm:$0xf]
    %v123 = vld [vmem:[%s0 + $0x170] sm:$0xf]
    %v124 = vld [vmem:[%s0 + $0x174] sm:$0xf]
    %v125 = vld [vmem:[%s0 + $0x178] sm:$0xf]
    %v126 = vld [vmem:[%s0 + $0x17c] sm:$0xf]
    %v127 = vld [vmem:[%s1] sm:$0xf]
    %v128 = vld [vmem:[%s1 + $0x4] sm:$0xf]
    %v129 = vld [vmem:[%s1 + $0x8] sm:$0xf]
    %v130 = vld [vmem:[%s1 + $0xc] sm:$0xf]
    %v131 = vld [vmem:[%s1 + $0x10] sm:$0xf]
    %v132 = vld [vmem:[%s1 + $0x14] sm:$0xf]
    %v133 = vld [vmem:[%s1 + $0x18] sm:$0x1]
    %v230 = vunpack.c.l.b16 %v31
    %v231 = vunpack.c.l.b16 %v32
    %v232 = vunpack.c.l.b16 %v33
    %v233 = vunpack.c.l.b16 %v34
    %v234 = vunpack.c.l.b16 %v35
    %v235 = vunpack.c.l.b16 %v36
    %v236 = vunpack.c.l.b16 %v37
    %v237 = vunpack.c.l.b16 %v38
    %v238 = vunpack.c.l.b16 %v39
    %v239 = vunpack.c.l.b16 %v40
    %v240 = vunpack.c.l.b16 %v41
    %v241 = vunpack.c.l.b16 %v42
    %v242 = vunpack.c.l.b16 %v43
    %v243 = vunpack.c.l.b16 %v44
    %v244 = vunpack.c.l.b16 %v45
    %v245 = vunpack.c.l.b16 %v46
    %v246 = vunpack.c.l.b16 %v47
    %v247 = vunpack.c.l.b16 %v48
    %v248 = vunpack.c.l.b16 %v49
    %v249 = vunpack.c.l.b16 %v50
    %v250 = vunpack.c.l.b16 %v51
    %v251 = vunpack.c.l.b16 %v52
    %v252 = vunpack.c.l.b16 %v53
    %v253 = vunpack.c.l.b16 %v54
    %v254 = vunpack.c.l.b16 %v55
    %v255 = vunpack.c.l.b16 %v56
    %v256 = vunpack.c.l.b16 %v57
    %v257 = vunpack.c.l.b16 %v58
    %v258 = vunpack.c.l.b16 %v59
    %v259 = vunpack.c.l.b16 %v60
    %v260 = vunpack.c.l.b16 %v61
    %v261 = vunpack.c.l.b16 %v62
    %v262 = vunpack.c.l.b16 %v63
    %v263 = vunpack.c.l.b16 %v64
    %v264 = vunpack.c.l.b16 %v65
    %v265 = vunpack.c.l.b16 %v66
    %v266 = vunpack.c.l.b16 %v67
    %v267 = vunpack.c.l.b16 %v68
    %v268 = vunpack.c.l.b16 %v69
    %v269 = vunpack.c.l.b16 %v70
    %v270 = vunpack.c.l.b16 %v71
    %v271 = vunpack.c.l.b16 %v72
    %v272 = vunpack.c.l.b16 %v73
    %v273 = vunpack.c.l.b16 %v74
    %v274 = vunpack.c.l.b16 %v75
    %v275 = vunpack.c.l.b16 %v76
    %v276 = vunpack.c.l.b16 %v77
    %v277 = vunpack.c.l.b16 %v78
    %v278 = vunpack.c.l.b16 %v79
    %v279 = vunpack.c.l.b16 %v80
    %v280 = vunpack.c.l.b16 %v81
    %v281 = vunpack.c.l.b16 %v82
    %v282 = vunpack.c.l.b16 %v83
    %v283 = vunpack.c.l.b16 %v84
    %v284 = vunpack.c.l.b16 %v85
    %v285 = vunpack.c.l.b16 %v86
    %v286 = vunpack.c.l.b16 %v87
    %v287 = vunpack.c.l.b16 %v88
    %v288 = vunpack.c.l.b16 %v89
    %v289 = vunpack.c.l.b16 %v90
    %v290 = vunpack.c.l.b16 %v91
    %v291 = vunpack.c.l.b16 %v92
    %v292 = vunpack.c.l.b16 %v93
    %v293 = vunpack.c.l.b16 %v94
    %v294 = vunpack.c.l.b16 %v95
    %v295 = vunpack.c.l.b16 %v96
    %v296 = vunpack.c.l.b16 %v97
    %v297 = vunpack.c.l.b16 %v98
    %v298 = vunpack.c.l.b16 %v99
    %v299 = vunpack.c.l.b16 %v100
    %v300 = vunpack.c.l.b16 %v101
    %v301 = vunpack.c.l.b16 %v102
    %v302 = vunpack.c.l.b16 %v103
    %v303 = vunpack.c.l.b16 %v104
    %v304 = vunpack.c.l.b16 %v105
    %v305 = vunpack.c.l.b16 %v106
    %v306 = vunpack.c.l.b16 %v107
    %v307 = vunpack.c.l.b16 %v108
    %v308 = vunpack.c.l.b16 %v109
    %v309 = vunpack.c.l.b16 %v110
    %v310 = vunpack.c.l.b16 %v111
    %v311 = vunpack.c.l.b16 %v112
    %v312 = vunpack.c.l.b16 %v113
    %v313 = vunpack.c.l.b16 %v114
    %v314 = vunpack.c.l.b16 %v115
    %v315 = vunpack.c.l.b16 %v116
    %v316 = vunpack.c.l.b16 %v117
    %v317 = vunpack.c.l.b16 %v118
    %v318 = vunpack.c.l.b16 %v119
    %v319 = vunpack.c.l.b16 %v120
    %v320 = vunpack.c.l.b16 %v121
    %v321 = vunpack.c.l.b16 %v122
    %v322 = vunpack.c.l.b16 %v123
    %v323 = vunpack.c.l.b16 %v124
    %v324 = vunpack.c.l.b16 %v125
    %v325 = vunpack.c.l.b16 %v126
    %v326 = vpack.c.b16 %v231, %v230
    %v327 = vpack.c.b16 %v233, %v232
    %v328 = vpack.c.b16 %v235, %v234
    %v329 = vpack.c.b16 %v237, %v236
    %v330 = vpack.c.b16 %v239, %v238
    %v331 = vpack.c.b16 %v241, %v240
    %v332 = vpack.c.b16 %v243, %v242
    %v333 = vpack.c.b16 %v245, %v244
    %v334 = vpack.c.b16 %v247, %v246
    %v335 = vpack.c.b16 %v249, %v248
    %v336 = vpack.c.b16 %v251, %v250
    %v337 = vpack.c.b16 %v253, %v252
    %v338 = vpack.c.b16 %v255, %v254
    %v339 = vpack.c.b16 %v257, %v256
    %v340 = vpack.c.b16 %v259, %v258
    %v341 = vpack.c.b16 %v261, %v260
    %v342 = vpack.c.b16 %v263, %v262
    %v343 = vpack.c.b16 %v265, %v264
    %v344 = vpack.c.b16 %v267, %v266
    %v345 = vpack.c.b16 %v269, %v268
    %v346 = vpack.c.b16 %v271, %v270
    %v347 = vpack.c.b16 %v273, %v272
    %v348 = vpack.c.b16 %v275, %v274
    %v349 = vpack.c.b16 %v277, %v276
    %v350 = vpack.c.b16 %v279, %v278
    %v351 = vpack.c.b16 %v281, %v280
    %v352 = vpack.c.b16 %v283, %v282
    %v353 = vpack.c.b16 %v285, %v284
    %v354 = vpack.c.b16 %v287, %v286
    %v355 = vpack.c.b16 %v289, %v288
    %v356 = vpack.c.b16 %v291, %v290
    %v357 = vpack.c.b16 %v293, %v292
    %v358 = vpack.c.b16 %v295, %v294
    %v359 = vpack.c.b16 %v297, %v296
    %v360 = vpack.c.b16 %v299, %v298
    %v361 = vpack.c.b16 %v301, %v300
    %v362 = vpack.c.b16 %v303, %v302
    %v363 = vpack.c.b16 %v305, %v304
    %v364 = vpack.c.b16 %v307, %v306
    %v365 = vpack.c.b16 %v309, %v308
    %v366 = vpack.c.b16 %v311, %v310
    %v367 = vpack.c.b16 %v313, %v312
    %v368 = vpack.c.b16 %v315, %v314
    %v369 = vpack.c.b16 %v317, %v316
    %v370 = vpack.c.b16 %v319, %v318
    %v371 = vpack.c.b16 %v321, %v320
    %v372 = vpack.c.b16 %v323, %v322
    %v373 = vpack.c.b16 %v325, %v324
    %v381 = vunpack.c.l.b16 %v127
    %v382 = vunpack.c.l.b16 %v128
    %v383 = vunpack.c.l.b16 %v129
    %v384 = vunpack.c.l.b16 %v130
    %v385 = vunpack.c.l.b16 %v131
    %v386 = vunpack.c.l.b16 %v132
    %v387 = vunpack.c.l.b16 %v133
    %v388 = vpack.c.b16 %v382, %v381
    %v389 = vpack.c.b16 %v384, %v383
    %v390 = vpack.c.b16 %v386, %v385
    %v391 = vpack.c.b16 %v387, %v387
    %vm395 = vcmask 400384
    %v397 = vsel %vm395, %v326, 0
    %v400 = vsel %vm395, %v327, 0
    %v403 = vsel %vm395, %v328, 0
    %v406 = vsel %vm395, %v329, 0
    %v409 = vsel %vm395, %v330, 0
    %v412 = vsel %vm395, %v331, 0
    %v415 = vsel %vm395, %v332, 0
    %v418 = vsel %vm395, %v333, 0
    %v421 = vsel %vm395, %v334, 0
    %v424 = vsel %vm395, %v335, 0
    %v427 = vsel %vm395, %v336, 0
    %v430 = vsel %vm395, %v337, 0
    %v433 = vsel %vm395, %v338, 0
    %v436 = vsel %vm395, %v339, 0
    %v439 = vsel %vm395, %v340, 0
    %v442 = vsel %vm395, %v341, 0
    %v445 = vsel %vm395, %v342, 0
    %v448 = vsel %vm395, %v343, 0
    %v451 = vsel %vm395, %v344, 0
    %v454 = vsel %vm395, %v345, 0
    %v457 = vsel %vm395, %v346, 0
    %v460 = vsel %vm395, %v347, 0
    %v463 = vsel %vm395, %v348, 0
    %v466 = vsel %vm395, %v349, 0
    %v469 = vsel %vm395, %v350, 0
    %v472 = vsel %vm395, %v351, 0
    %v475 = vsel %vm395, %v352, 0
    %v478 = vsel %vm395, %v353, 0
    %v481 = vsel %vm395, %v354, 0
    %v484 = vsel %vm395, %v355, 0
    %v487 = vsel %vm395, %v356, 0
    %v490 = vsel %vm395, %v357, 0
    %v493 = vsel %vm395, %v358, 0
    %v496 = vsel %vm395, %v359, 0
    %v499 = vsel %vm395, %v360, 0
    %v502 = vsel %vm395, %v361, 0
    %v505 = vsel %vm395, %v362, 0
    %v508 = vsel %vm395, %v363, 0
    %v511 = vsel %vm395, %v364, 0
    %v514 = vsel %vm395, %v365, 0
    %v517 = vsel %vm395, %v366, 0
    %v520 = vsel %vm395, %v367, 0
    %v523 = vsel %vm395, %v368, 0
    %v526 = vsel %vm395, %v369, 0
    %v529 = vsel %vm395, %v370, 0
    %v532 = vsel %vm395, %v371, 0
    %v535 = vsel %vm395, %v372, 0
    %v538 = vsel %vm395, %v373, 0
    %vm540 = vcmask 1040384
    %v541 = vsel 0, 4294967295, 65535
    %v542 = vsel %vm540, %v541, 0
    %v544 = vand.u32 %v391, %v542
    %546 = vmatpush.bf16.msra.mxu0 0
    %547 = vmatpush.bf16.msra.mxu0 0
    %548 = vmatpush.bf16.msra.mxu0 0
    %549 = vmatpush.bf16.msra.mxu0 0
    %550 = vmatpush.bf16.msra.mxu0 %v544
    %551 = vmatpush.bf16.msra.mxu0 %v390
    %552 = vmatpush.bf16.msra.mxu0 %v389
    %553 = vmatpush.bf16.msra.mxu0 %v388
    %554 = vmatmul.bf16.gmra.mxu0 %v397
    %v555 = vpop.f32.mrf.mxu0
    %v556 = vadd.f32 0.0, %v555
    %v557 = vpop.f32.mrf.mxu0
    %v558 = vadd.f32 0.0, %v557
    %559 = vmatmul.bf16.gmra.mxu0 %v400
    %v560 = vpop.f32.mrf.mxu0
    %v561 = vadd.f32 0.0, %v560
    %v562 = vpop.f32.mrf.mxu0
    %v563 = vadd.f32 0.0, %v562
    %564 = vmatmul.bf16.gmra.mxu0 %v403
    %v565 = vpop.f32.mrf.mxu0
    %v566 = vadd.f32 0.0, %v565
    %v567 = vpop.f32.mrf.mxu0
    %v568 = vadd.f32 0.0, %v567
    %569 = vmatmul.bf16.gmra.mxu0 %v406
    %v570 = vpop.f32.mrf.mxu0
    %v571 = vadd.f32 0.0, %v570
    %v572 = vpop.f32.mrf.mxu0
    %v573 = vadd.f32 0.0, %v572
    %574 = vmatmul.bf16.gmra.mxu0 %v409
    %v575 = vpop.f32.mrf.mxu0
    %v576 = vadd.f32 0.0, %v575
    %v577 = vpop.f32.mrf.mxu0
    %v578 = vadd.f32 0.0, %v577
    %579 = vmatmul.bf16.gmra.mxu0 %v412
    %v580 = vpop.f32.mrf.mxu0
    %v581 = vadd.f32 0.0, %v580
    %v582 = vpop.f32.mrf.mxu0
    %v583 = vadd.f32 0.0, %v582
    %584 = vmatmul.bf16.gmra.mxu0 %v415
    %v585 = vpop.f32.mrf.mxu0
    %v586 = vadd.f32 0.0, %v585
    %v587 = vpop.f32.mrf.mxu0
    %v588 = vadd.f32 0.0, %v587
    %589 = vmatmul.bf16.gmra.mxu0 %v418
    %v590 = vpop.f32.mrf.mxu0
    %v591 = vadd.f32 0.0, %v590
    %v592 = vpop.f32.mrf.mxu0
    %v593 = vadd.f32 0.0, %v592
    %594 = vmatmul.bf16.gmra.mxu0 %v421
    %v595 = vpop.f32.mrf.mxu0
    %v596 = vadd.f32 0.0, %v595
    %v597 = vpop.f32.mrf.mxu0
    %v598 = vadd.f32 0.0, %v597
    %599 = vmatmul.bf16.gmra.mxu0 %v424
    %v600 = vpop.f32.mrf.mxu0
    %v601 = vadd.f32 0.0, %v600
    %v602 = vpop.f32.mrf.mxu0
    %v603 = vadd.f32 0.0, %v602
    %604 = vmatmul.bf16.gmra.mxu0 %v427
    %v605 = vpop.f32.mrf.mxu0
    %v606 = vadd.f32 0.0, %v605
    %v607 = vpop.f32.mrf.mxu0
    %v608 = vadd.f32 0.0, %v607
    %609 = vmatmul.bf16.gmra.mxu0 %v430
    %v610 = vpop.f32.mrf.mxu0
    %v611 = vadd.f32 0.0, %v610
    %v612 = vpop.f32.mrf.mxu0
    %v613 = vadd.f32 0.0, %v612
    %614 = vmatmul.bf16.gmra.mxu0 %v433
    %v615 = vpop.f32.mrf.mxu0
    %v616 = vadd.f32 0.0, %v615
    %v617 = vpop.f32.mrf.mxu0
    %v618 = vadd.f32 0.0, %v617
    %619 = vmatmul.bf16.gmra.mxu0 %v436
    %v620 = vpop.f32.mrf.mxu0
    %v621 = vadd.f32 0.0, %v620
    %v622 = vpop.f32.mrf.mxu0
    %v623 = vadd.f32 0.0, %v622
    %624 = vmatmul.bf16.gmra.mxu0 %v439
    %v625 = vpop.f32.mrf.mxu0
    %v626 = vadd.f32 0.0, %v625
    %v627 = vpop.f32.mrf.mxu0
    %v628 = vadd.f32 0.0, %v627
    %629 = vmatmul.bf16.gmra.mxu0 %v442
    %v630 = vpop.f32.mrf.mxu0
    %v631 = vadd.f32 0.0, %v630
    %v632 = vpop.f32.mrf.mxu0
    %v633 = vadd.f32 0.0, %v632
    %634 = vmatmul.bf16.gmra.mxu0 %v445
    %v635 = vpop.f32.mrf.mxu0
    %v636 = vadd.f32 0.0, %v635
    %v637 = vpop.f32.mrf.mxu0
    %v638 = vadd.f32 0.0, %v637
    %639 = vmatmul.bf16.gmra.mxu0 %v448
    %v640 = vpop.f32.mrf.mxu0
    %v641 = vadd.f32 0.0, %v640
    %v642 = vpop.f32.mrf.mxu0
    %v643 = vadd.f32 0.0, %v642
    %644 = vmatmul.bf16.gmra.mxu0 %v451
    %v645 = vpop.f32.mrf.mxu0
    %v646 = vadd.f32 0.0, %v645
    %v647 = vpop.f32.mrf.mxu0
    %v648 = vadd.f32 0.0, %v647
    %649 = vmatmul.bf16.gmra.mxu0 %v454
    %v650 = vpop.f32.mrf.mxu0
    %v651 = vadd.f32 0.0, %v650
    %v652 = vpop.f32.mrf.mxu0
    %v653 = vadd.f32 0.0, %v652
    %654 = vmatmul.bf16.gmra.mxu0 %v457
    %v655 = vpop.f32.mrf.mxu0
    %v656 = vadd.f32 0.0, %v655
    %v657 = vpop.f32.mrf.mxu0
    %v658 = vadd.f32 0.0, %v657
    %659 = vmatmul.bf16.gmra.mxu0 %v460
    %v660 = vpop.f32.mrf.mxu0
    %v661 = vadd.f32 0.0, %v660
    %v662 = vpop.f32.mrf.mxu0
    %v663 = vadd.f32 0.0, %v662
    %664 = vmatmul.bf16.gmra.mxu0 %v463
    %v665 = vpop.f32.mrf.mxu0
    %v666 = vadd.f32 0.0, %v665
    %v667 = vpop.f32.mrf.mxu0
    %v668 = vadd.f32 0.0, %v667
    %669 = vmatmul.bf16.gmra.mxu0 %v466
    %v670 = vpop.f32.mrf.mxu0
    %v671 = vadd.f32 0.0, %v670
    %v672 = vpop.f32.mrf.mxu0
    %v673 = vadd.f32 0.0, %v672
    %674 = vmatmul.bf16.gmra.mxu0 %v469
    %v675 = vpop.f32.mrf.mxu0
    %v676 = vadd.f32 0.0, %v675
    %v677 = vpop.f32.mrf.mxu0
    %v678 = vadd.f32 0.0, %v677
    %679 = vmatmul.bf16.gmra.mxu0 %v472
    %v680 = vpop.f32.mrf.mxu0
    %v681 = vadd.f32 0.0, %v680
    %v682 = vpop.f32.mrf.mxu0
    %v683 = vadd.f32 0.0, %v682
    %684 = vmatmul.bf16.gmra.mxu0 %v475
    %v685 = vpop.f32.mrf.mxu0
    %v686 = vadd.f32 0.0, %v685
    %v687 = vpop.f32.mrf.mxu0
    %v688 = vadd.f32 0.0, %v687
    %689 = vmatmul.bf16.gmra.mxu0 %v478
    %v690 = vpop.f32.mrf.mxu0
    %v691 = vadd.f32 0.0, %v690
    %v692 = vpop.f32.mrf.mxu0
    %v693 = vadd.f32 0.0, %v692
    %694 = vmatmul.bf16.gmra.mxu0 %v481
    %v695 = vpop.f32.mrf.mxu0
    %v696 = vadd.f32 0.0, %v695
    %v697 = vpop.f32.mrf.mxu0
    %v698 = vadd.f32 0.0, %v697
    %699 = vmatmul.bf16.gmra.mxu0 %v484
    %v700 = vpop.f32.mrf.mxu0
    %v701 = vadd.f32 0.0, %v700
    %v702 = vpop.f32.mrf.mxu0
    %v703 = vadd.f32 0.0, %v702
    %704 = vmatmul.bf16.gmra.mxu0 %v487
    %v705 = vpop.f32.mrf.mxu0
    %v706 = vadd.f32 0.0, %v705
    %v707 = vpop.f32.mrf.mxu0
    %v708 = vadd.f32 0.0, %v707
    %709 = vmatmul.bf16.gmra.mxu0 %v490
    %v710 = vpop.f32.mrf.mxu0
    %v711 = vadd.f32 0.0, %v710
    %v712 = vpop.f32.mrf.mxu0
    %v713 = vadd.f32 0.0, %v712
    %714 = vmatmul.bf16.gmra.mxu0 %v493
    %v715 = vpop.f32.mrf.mxu0
    %v716 = vadd.f32 0.0, %v715
    %v717 = vpop.f32.mrf.mxu0
    %v718 = vadd.f32 0.0, %v717
    %719 = vmatmul.bf16.gmra.mxu0 %v496
    %v720 = vpop.f32.mrf.mxu0
    %v721 = vadd.f32 0.0, %v720
    %v722 = vpop.f32.mrf.mxu0
    %v723 = vadd.f32 0.0, %v722
    %724 = vmatmul.bf16.gmra.mxu0 %v499
    %v725 = vpop.f32.mrf.mxu0
    %v726 = vadd.f32 0.0, %v725
    %v727 = vpop.f32.mrf.mxu0
    %v728 = vadd.f32 0.0, %v727
    %729 = vmatmul.bf16.gmra.mxu0 %v502
    %v730 = vpop.f32.mrf.mxu0
    %v731 = vadd.f32 0.0, %v730
    %v732 = vpop.f32.mrf.mxu0
    %v733 = vadd.f32 0.0, %v732
    %734 = vmatmul.bf16.gmra.mxu0 %v505
    %v735 = vpop.f32.mrf.mxu0
    %v736 = vadd.f32 0.0, %v735
    %v737 = vpop.f32.mrf.mxu0
    %v738 = vadd.f32 0.0, %v737
    %739 = vmatmul.bf16.gmra.mxu0 %v508
    %v740 = vpop.f32.mrf.mxu0
    %v741 = vadd.f32 0.0, %v740
    %v742 = vpop.f32.mrf.mxu0
    %v743 = vadd.f32 0.0, %v742
    %744 = vmatmul.bf16.gmra.mxu0 %v511
    %v745 = vpop.f32.mrf.mxu0
    %v746 = vadd.f32 0.0, %v745
    %v747 = vpop.f32.mrf.mxu0
    %v748 = vadd.f32 0.0, %v747
    %749 = vmatmul.bf16.gmra.mxu0 %v514
    %v750 = vpop.f32.mrf.mxu0
    %v751 = vadd.f32 0.0, %v750
    %v752 = vpop.f32.mrf.mxu0
    %v753 = vadd.f32 0.0, %v752
    %754 = vmatmul.bf16.gmra.mxu0 %v517
    %v755 = vpop.f32.mrf.mxu0
    %v756 = vadd.f32 0.0, %v755
    %v757 = vpop.f32.mrf.mxu0
    %v758 = vadd.f32 0.0, %v757
    %759 = vmatmul.bf16.gmra.mxu0 %v520
    %v760 = vpop.f32.mrf.mxu0
    %v761 = vadd.f32 0.0, %v760
    %v762 = vpop.f32.mrf.mxu0
    %v763 = vadd.f32 0.0, %v762
    %764 = vmatmul.bf16.gmra.mxu0 %v523
    %v765 = vpop.f32.mrf.mxu0
    %v766 = vadd.f32 0.0, %v765
    %v767 = vpop.f32.mrf.mxu0
    %v768 = vadd.f32 0.0, %v767
    %769 = vmatmul.bf16.gmra.mxu0 %v526
    %v770 = vpop.f32.mrf.mxu0
    %v771 = vadd.f32 0.0, %v770
    %v772 = vpop.f32.mrf.mxu0
    %v773 = vadd.f32 0.0, %v772
    %774 = vmatmul.bf16.gmra.mxu0 %v529
    %v775 = vpop.f32.mrf.mxu0
    %v776 = vadd.f32 0.0, %v775
    %v777 = vpop.f32.mrf.mxu0
    %v778 = vadd.f32 0.0, %v777
    %779 = vmatmul.bf16.gmra.mxu0 %v532
    %v780 = vpop.f32.mrf.mxu0
    %v781 = vadd.f32 0.0, %v780
    %v782 = vpop.f32.mrf.mxu0
    %v783 = vadd.f32 0.0, %v782
    %784 = vmatmul.bf16.gmra.mxu0 %v535
    %v785 = vpop.f32.mrf.mxu0
    %v786 = vadd.f32 0.0, %v785
    %v787 = vpop.f32.mrf.mxu0
    %v788 = vadd.f32 0.0, %v787
    %789 = vmatmul.bf16.gmra.mxu0 %v538
    %v790 = vpop.f32.mrf.mxu0
    %v791 = vadd.f32 0.0, %v790
    %v792 = vpop.f32.mrf.mxu0
    %v793 = vadd.f32 0.0, %v792
    %794 = vdwg.mxu0
    %v795 = vmax.f32 %v556, 0.0
    %v796 = vmax.f32 %v558, 0.0
    %v797 = vmax.f32 %v561, 0.0
    %v798 = vmax.f32 %v563, 0.0
    %v799 = vmax.f32 %v566, 0.0
    %v800 = vmax.f32 %v568, 0.0
    %v801 = vmax.f32 %v571, 0.0
    %v802 = vmax.f32 %v573, 0.0
    %v803 = vmax.f32 %v576, 0.0
    %v804 = vmax.f32 %v578, 0.0
    %v805 = vmax.f32 %v581, 0.0
    %v806 = vmax.f32 %v583, 0.0
    %v807 = vmax.f32 %v586, 0.0
    %v808 = vmax.f32 %v588, 0.0
    %v809 = vmax.f32 %v591, 0.0
    %v810 = vmax.f32 %v593, 0.0
    %v811 = vmax.f32 %v596, 0.0
    %v812 = vmax.f32 %v598, 0.0
    %v813 = vmax.f32 %v601, 0.0
    %v814 = vmax.f32 %v603, 0.0
    %v815 = vmax.f32 %v606, 0.0
    %v816 = vmax.f32 %v608, 0.0
    %v817 = vmax.f32 %v611, 0.0
    %v818 = vmax.f32 %v613, 0.0
    %v819 = vmax.f32 %v616, 0.0
    %v820 = vmax.f32 %v618, 0.0
    %v821 = vmax.f32 %v621, 0.0
    %v822 = vmax.f32 %v623, 0.0
    %v823 = vmax.f32 %v626, 0.0
    %v824 = vmax.f32 %v628, 0.0
    %v825 = vmax.f32 %v631, 0.0
    %v826 = vmax.f32 %v633, 0.0
    %v827 = vmax.f32 %v636, 0.0
    %v828 = vmax.f32 %v638, 0.0
    %v829 = vmax.f32 %v641, 0.0
    %v830 = vmax.f32 %v643, 0.0
    %v831 = vmax.f32 %v646, 0.0
    %v832 = vmax.f32 %v648, 0.0
    %v833 = vmax.f32 %v651, 0.0
    %v834 = vmax.f32 %v653, 0.0
    %v835 = vmax.f32 %v656, 0.0
    %v836 = vmax.f32 %v658, 0.0
    %v837 = vmax.f32 %v661, 0.0
    %v838 = vmax.f32 %v663, 0.0
    %v839 = vmax.f32 %v666, 0.0
    %v840 = vmax.f32 %v668, 0.0
    %v841 = vmax.f32 %v671, 0.0
    %v842 = vmax.f32 %v673, 0.0
    %v843 = vmax.f32 %v676, 0.0
    %v844 = vmax.f32 %v678, 0.0
    %v845 = vmax.f32 %v681, 0.0
    %v846 = vmax.f32 %v683, 0.0
    %v847 = vmax.f32 %v686, 0.0
    %v848 = vmax.f32 %v688, 0.0
    %v849 = vmax.f32 %v691, 0.0
    %v850 = vmax.f32 %v693, 0.0
    %v851 = vmax.f32 %v696, 0.0
    %v852 = vmax.f32 %v698, 0.0
    %v853 = vmax.f32 %v701, 0.0
    %v854 = vmax.f32 %v703, 0.0
    %v855 = vmax.f32 %v706, 0.0
    %v856 = vmax.f32 %v708, 0.0
    %v857 = vmax.f32 %v711, 0.0
    %v858 = vmax.f32 %v713, 0.0
    %v859 = vmax.f32 %v716, 0.0
    %v860 = vmax.f32 %v718, 0.0
    %v861 = vmax.f32 %v721, 0.0
    %v862 = vmax.f32 %v723, 0.0
    %v863 = vmax.f32 %v726, 0.0
    %v864 = vmax.f32 %v728, 0.0
    %v865 = vmax.f32 %v731, 0.0
    %v866 = vmax.f32 %v733, 0.0
    %v867 = vmax.f32 %v736, 0.0
    %v868 = vmax.f32 %v738, 0.0
    %v869 = vmax.f32 %v741, 0.0
    %v870 = vmax.f32 %v743, 0.0
    %v871 = vmax.f32 %v746, 0.0
    %v872 = vmax.f32 %v748, 0.0
    %v873 = vmax.f32 %v751, 0.0
    %v874 = vmax.f32 %v753, 0.0
    %v875 = vmax.f32 %v756, 0.0
    %v876 = vmax.f32 %v758, 0.0
    %v877 = vmax.f32 %v761, 0.0
    %v878 = vmax.f32 %v763, 0.0
    %v879 = vmax.f32 %v766, 0.0
    %v880 = vmax.f32 %v768, 0.0
    %v881 = vmax.f32 %v771, 0.0
    %v882 = vmax.f32 %v773, 0.0
    %v883 = vmax.f32 %v776, 0.0
    %v884 = vmax.f32 %v778, 0.0
    %v885 = vmax.f32 %v781, 0.0
    %v886 = vmax.f32 %v783, 0.0
    %v887 = vmax.f32 %v786, 0.0
    %v888 = vmax.f32 %v788, 0.0
    %v889 = vmax.f32 %v791, 0.0
    %v890 = vmax.f32 %v793, 0.0
    %vm891 = vcmask 523264
    %v892 = vsel %vm891, %v795, 0.0
    %v893 = vsel %vm891, %v796, 0.0
    %v894 = vadd.f32 %v892, %v893
    %v895 = vsel %vm891, %v797, 0.0
    %v896 = vadd.f32 %v894, %v895
    %v897 = vsel %vm891, %v798, 0.0
    %v898 = vadd.f32 %v896, %v897
    %v899 = vsel %vm891, %v799, 0.0
    %v900 = vadd.f32 %v898, %v899
    %v901 = vsel %vm891, %v800, 0.0
    %v902 = vadd.f32 %v900, %v901
    %v903 = vsel %vm891, %v801, 0.0
    %v904 = vadd.f32 %v902, %v903
    %v905 = vsel %vm891, %v802, 0.0
    %v906 = vadd.f32 %v904, %v905
    %v907 = vrot.slane %v906, 4
    %v908 = vadd.f32 %v906, %v907
    %v909 = vrot.slane %v908, 2
    %v910 = vadd.f32 %v908, %v909
    %v911 = vrot.slane %v910, 1
    %v912 = vadd.f32 %v910, %v911
    %v913 = vsel %vm891, %v803, 0.0
    %v914 = vsel %vm891, %v804, 0.0
    %v915 = vadd.f32 %v913, %v914
    %v916 = vsel %vm891, %v805, 0.0
    %v917 = vadd.f32 %v915, %v916
    %v918 = vsel %vm891, %v806, 0.0
    %v919 = vadd.f32 %v917, %v918
    %v920 = vsel %vm891, %v807, 0.0
    %v921 = vadd.f32 %v919, %v920
    %v922 = vsel %vm891, %v808, 0.0
    %v923 = vadd.f32 %v921, %v922
    %v924 = vsel %vm891, %v809, 0.0
    %v925 = vadd.f32 %v923, %v924
    %v926 = vsel %vm891, %v810, 0.0
    %v927 = vadd.f32 %v925, %v926
    %v928 = vrot.slane %v927, 4
    %v929 = vadd.f32 %v927, %v928
    %v930 = vrot.slane %v929, 2
    %v931 = vadd.f32 %v929, %v930
    %v932 = vrot.slane %v931, 1
    %v933 = vadd.f32 %v931, %v932
    %v934 = vsel %vm891, %v811, 0.0
    %v935 = vsel %vm891, %v812, 0.0
    %v936 = vadd.f32 %v934, %v935
    %v937 = vsel %vm891, %v813, 0.0
    %v938 = vadd.f32 %v936, %v937
    %v939 = vsel %vm891, %v814, 0.0
    %v940 = vadd.f32 %v938, %v939
    %v941 = vsel %vm891, %v815, 0.0
    %v942 = vadd.f32 %v940, %v941
    %v943 = vsel %vm891, %v816, 0.0
    %v944 = vadd.f32 %v942, %v943
    %v945 = vsel %vm891, %v817, 0.0
    %v946 = vadd.f32 %v944, %v945
    %v947 = vsel %vm891, %v818, 0.0
    %v948 = vadd.f32 %v946, %v947
    %v949 = vrot.slane %v948, 4
    %v950 = vadd.f32 %v948, %v949
    %v951 = vrot.slane %v950, 2
    %v952 = vadd.f32 %v950, %v951
    %v953 = vrot.slane %v952, 1
    %v954 = vadd.f32 %v952, %v953
    %v955 = vsel %vm891, %v819, 0.0
    %v956 = vsel %vm891, %v820, 0.0
    %v957 = vadd.f32 %v955, %v956
    %v958 = vsel %vm891, %v821, 0.0
    %v959 = vadd.f32 %v957, %v958
    %v960 = vsel %vm891, %v822, 0.0
    %v961 = vadd.f32 %v959, %v960
    %v962 = vsel %vm891, %v823, 0.0
    %v963 = vadd.f32 %v961, %v962
    %v964 = vsel %vm891, %v824, 0.0
    %v965 = vadd.f32 %v963, %v964
    %v966 = vsel %vm891, %v825, 0.0
    %v967 = vadd.f32 %v965, %v966
    %v968 = vsel %vm891, %v826, 0.0
    %v969 = vadd.f32 %v967, %v968
    %v970 = vrot.slane %v969, 4
    %v971 = vadd.f32 %v969, %v970
    %v972 = vrot.slane %v971, 2
    %v973 = vadd.f32 %v971, %v972
    %v974 = vrot.slane %v973, 1
    %v975 = vadd.f32 %v973, %v974
    %v976 = vsel %vm891, %v827, 0.0
    %v977 = vsel %vm891, %v828, 0.0
    %v978 = vadd.f32 %v976, %v977
    %v979 = vsel %vm891, %v829, 0.0
    %v980 = vadd.f32 %v978, %v979
    %v981 = vsel %vm891, %v830, 0.0
    %v982 = vadd.f32 %v980, %v981
    %v983 = vsel %vm891, %v831, 0.0
    %v984 = vadd.f32 %v982, %v983
    %v985 = vsel %vm891, %v832, 0.0
    %v986 = vadd.f32 %v984, %v985
    %v987 = vsel %vm891, %v833, 0.0
    %v988 = vadd.f32 %v986, %v987
    %v989 = vsel %vm891, %v834, 0.0
    %v990 = vadd.f32 %v988, %v989
    %v991 = vrot.slane %v990, 4
    %v992 = vadd.f32 %v990, %v991
    %v993 = vrot.slane %v992, 2
    %v994 = vadd.f32 %v992, %v993
    %v995 = vrot.slane %v994, 1
    %v996 = vadd.f32 %v994, %v995
    %v997 = vsel %vm891, %v835, 0.0
    %v998 = vsel %vm891, %v836, 0.0
    %v999 = vadd.f32 %v997, %v998
    %v1000 = vsel %vm891, %v837, 0.0
    %v1001 = vadd.f32 %v999, %v1000
    %v1002 = vsel %vm891, %v838, 0.0
    %v1003 = vadd.f32 %v1001, %v1002
    %v1004 = vsel %vm891, %v839, 0.0
    %v1005 = vadd.f32 %v1003, %v1004
    %v1006 = vsel %vm891, %v840, 0.0
    %v1007 = vadd.f32 %v1005, %v1006
    %v1008 = vsel %vm891, %v841, 0.0
    %v1009 = vadd.f32 %v1007, %v1008
    %v1010 = vsel %vm891, %v842, 0.0
    %v1011 = vadd.f32 %v1009, %v1010
    %v1012 = vrot.slane %v1011, 4
    %v1013 = vadd.f32 %v1011, %v1012
    %v1014 = vrot.slane %v1013, 2
    %v1015 = vadd.f32 %v1013, %v1014
    %v1016 = vrot.slane %v1015, 1
    %v1017 = vadd.f32 %v1015, %v1016
    %v1018 = vsel %vm891, %v843, 0.0
    %v1019 = vsel %vm891, %v844, 0.0
    %v1020 = vadd.f32 %v1018, %v1019
    %v1021 = vsel %vm891, %v845, 0.0
    %v1022 = vadd.f32 %v1020, %v1021
    %v1023 = vsel %vm891, %v846, 0.0
    %v1024 = vadd.f32 %v1022, %v1023
    %v1025 = vsel %vm891, %v847, 0.0
    %v1026 = vadd.f32 %v1024, %v1025
    %v1027 = vsel %vm891, %v848, 0.0
    %v1028 = vadd.f32 %v1026, %v1027
    %v1029 = vsel %vm891, %v849, 0.0
    %v1030 = vadd.f32 %v1028, %v1029
    %v1031 = vsel %vm891, %v850, 0.0
    %v1032 = vadd.f32 %v1030, %v1031
    %v1033 = vrot.slane %v1032, 4
    %v1034 = vadd.f32 %v1032, %v1033
    %v1035 = vrot.slane %v1034, 2
    %v1036 = vadd.f32 %v1034, %v1035
    %v1037 = vrot.slane %v1036, 1
    %v1038 = vadd.f32 %v1036, %v1037
    %v1039 = vsel %vm891, %v851, 0.0
    %v1040 = vsel %vm891, %v852, 0.0
    %v1041 = vadd.f32 %v1039, %v1040
    %v1042 = vsel %vm891, %v853, 0.0
    %v1043 = vadd.f32 %v1041, %v1042
    %v1044 = vsel %vm891, %v854, 0.0
    %v1045 = vadd.f32 %v1043, %v1044
    %v1046 = vsel %vm891, %v855, 0.0
    %v1047 = vadd.f32 %v1045, %v1046
    %v1048 = vsel %vm891, %v856, 0.0
    %v1049 = vadd.f32 %v1047, %v1048
    %v1050 = vsel %vm891, %v857, 0.0
    %v1051 = vadd.f32 %v1049, %v1050
    %v1052 = vsel %vm891, %v858, 0.0
    %v1053 = vadd.f32 %v1051, %v1052
    %v1054 = vrot.slane %v1053, 4
    %v1055 = vadd.f32 %v1053, %v1054
    %v1056 = vrot.slane %v1055, 2
    %v1057 = vadd.f32 %v1055, %v1056
    %v1058 = vrot.slane %v1057, 1
    %v1059 = vadd.f32 %v1057, %v1058
    %v1060 = vsel %vm891, %v859, 0.0
    %v1061 = vsel %vm891, %v860, 0.0
    %v1062 = vadd.f32 %v1060, %v1061
    %v1063 = vsel %vm891, %v861, 0.0
    %v1064 = vadd.f32 %v1062, %v1063
    %v1065 = vsel %vm891, %v862, 0.0
    %v1066 = vadd.f32 %v1064, %v1065
    %v1067 = vsel %vm891, %v863, 0.0
    %v1068 = vadd.f32 %v1066, %v1067
    %v1069 = vsel %vm891, %v864, 0.0
    %v1070 = vadd.f32 %v1068, %v1069
    %v1071 = vsel %vm891, %v865, 0.0
    %v1072 = vadd.f32 %v1070, %v1071
    %v1073 = vsel %vm891, %v866, 0.0
    %v1074 = vadd.f32 %v1072, %v1073
    %v1075 = vrot.slane %v1074, 4
    %v1076 = vadd.f32 %v1074, %v1075
    %v1077 = vrot.slane %v1076, 2
    %v1078 = vadd.f32 %v1076, %v1077
    %v1079 = vrot.slane %v1078, 1
    %v1080 = vadd.f32 %v1078, %v1079
    %v1081 = vsel %vm891, %v867, 0.0
    %v1082 = vsel %vm891, %v868, 0.0
    %v1083 = vadd.f32 %v1081, %v1082
    %v1084 = vsel %vm891, %v869, 0.0
    %v1085 = vadd.f32 %v1083, %v1084
    %v1086 = vsel %vm891, %v870, 0.0
    %v1087 = vadd.f32 %v1085, %v1086
    %v1088 = vsel %vm891, %v871, 0.0
    %v1089 = vadd.f32 %v1087, %v1088
    %v1090 = vsel %vm891, %v872, 0.0
    %v1091 = vadd.f32 %v1089, %v1090
    %v1092 = vsel %vm891, %v873, 0.0
    %v1093 = vadd.f32 %v1091, %v1092
    %v1094 = vsel %vm891, %v874, 0.0
    %v1095 = vadd.f32 %v1093, %v1094
    %v1096 = vrot.slane %v1095, 4
    %v1097 = vadd.f32 %v1095, %v1096
    %v1098 = vrot.slane %v1097, 2
    %v1099 = vadd.f32 %v1097, %v1098
    %v1100 = vrot.slane %v1099, 1
    %v1101 = vadd.f32 %v1099, %v1100
    %v1102 = vsel %vm891, %v875, 0.0
    %v1103 = vsel %vm891, %v876, 0.0
    %v1104 = vadd.f32 %v1102, %v1103
    %v1105 = vsel %vm891, %v877, 0.0
    %v1106 = vadd.f32 %v1104, %v1105
    %v1107 = vsel %vm891, %v878, 0.0
    %v1108 = vadd.f32 %v1106, %v1107
    %v1109 = vsel %vm891, %v879, 0.0
    %v1110 = vadd.f32 %v1108, %v1109
    %v1111 = vsel %vm891, %v880, 0.0
    %v1112 = vadd.f32 %v1110, %v1111
    %v1113 = vsel %vm891, %v881, 0.0
    %v1114 = vadd.f32 %v1112, %v1113
    %v1115 = vsel %vm891, %v882, 0.0
    %v1116 = vadd.f32 %v1114, %v1115
    %v1117 = vrot.slane %v1116, 4
    %v1118 = vadd.f32 %v1116, %v1117
    %v1119 = vrot.slane %v1118, 2
    %v1120 = vadd.f32 %v1118, %v1119
    %v1121 = vrot.slane %v1120, 1
    %v1122 = vadd.f32 %v1120, %v1121
    %v1123 = vsel %vm891, %v883, 0.0
    %v1124 = vsel %vm891, %v884, 0.0
    %v1125 = vadd.f32 %v1123, %v1124
    %v1126 = vsel %vm891, %v885, 0.0
    %v1127 = vadd.f32 %v1125, %v1126
    %v1128 = vsel %vm891, %v886, 0.0
    %v1129 = vadd.f32 %v1127, %v1128
    %v1130 = vsel %vm891, %v887, 0.0
    %v1131 = vadd.f32 %v1129, %v1130
    %v1132 = vsel %vm891, %v888, 0.0
    %v1133 = vadd.f32 %v1131, %v1132
    %v1134 = vsel %vm891, %v889, 0.0
    %v1135 = vadd.f32 %v1133, %v1134
    %v1136 = vsel %vm891, %v890, 0.0
    %v1137 = vadd.f32 %v1135, %v1136
    %v1138 = vrot.slane %v1137, 4
    %v1139 = vadd.f32 %v1137, %v1138
    %v1140 = vrot.slane %v1139, 2
    %v1141 = vadd.f32 %v1139, %v1140
    %v1142 = vrot.slane %v1141, 1
    %v1143 = vadd.f32 %v1141, %v1142
    %v1144 = vrcp.pop 64.0
    %v1145 = vmul.f32 64.0, %v1144
    %v1146 = vsub.f32 1.0, %v1145
    %v1147 = vmul.f32 %v1144, %v1146
    %v1148 = vadd.f32 %v1144, %v1147
    %vm1149 = vweird.f32 %v1144
    %v1150 = vsel %vm1149, %v1144, %v1148
    %v1151 = vmul.f32 %v912, %v1150
    %v1152 = vmul.f32 %v933, %v1150
    %v1153 = vmul.f32 %v954, %v1150
    %v1154 = vmul.f32 %v975, %v1150
    %v1155 = vmul.f32 %v996, %v1150
    %v1156 = vmul.f32 %v1017, %v1150
    %v1157 = vmul.f32 %v1038, %v1150
    %v1158 = vmul.f32 %v1059, %v1150
    %v1159 = vmul.f32 %v1080, %v1150
    %v1160 = vmul.f32 %v1101, %v1150
    %v1161 = vmul.f32 %v1122, %v1150
    %v1162 = vmul.f32 %v1143, %v1150
    %v1163 = vpack.c.bf16 %v1151, %v1151
    %v1164 = vpack.c.bf16 %v1152, %v1152
    %v1165 = vpack.c.bf16 %v1153, %v1153
    %v1166 = vpack.c.bf16 %v1154, %v1154
    %v1167 = vpack.c.bf16 %v1155, %v1155
    %v1168 = vpack.c.bf16 %v1156, %v1156
    %v1169 = vpack.c.bf16 %v1157, %v1157
    %v1170 = vpack.c.bf16 %v1158, %v1158
    %v1171 = vpack.c.bf16 %v1159, %v1159
    %v1172 = vpack.c.bf16 %v1160, %v1160
    %v1173 = vpack.c.bf16 %v1161, %v1161
    %v1174 = vpack.c.bf16 %v1162, %v1162
    %v1175 = vld [vmem:[%s2] sm:$0xf]
    %v1176 = vld [vmem:[%s2 + $0x4] sm:$0xf]
    %v1177 = vld [vmem:[%s2 + $0x8] sm:$0xf]
    %v1178 = vld [vmem:[%s2 + $0xc] sm:$0xf]
    %v1179 = vld [vmem:[%s2 + $0x10] sm:$0xf]
    %v1180 = vld [vmem:[%s2 + $0x14] sm:$0xf]
    %v1181 = vld [vmem:[%s2 + $0x18] sm:$0xf]
    %v1182 = vld [vmem:[%s2 + $0x1c] sm:$0xf]
    %v1195 = vunpack.c.l.b16 %v1163
    %v1196 = vunpack.c.l.b16 %v1164
    %v1197 = vunpack.c.l.b16 %v1165
    %v1198 = vunpack.c.l.b16 %v1166
    %v1199 = vunpack.c.l.b16 %v1167
    %v1200 = vunpack.c.l.b16 %v1168
    %v1201 = vunpack.c.l.b16 %v1169
    %v1202 = vunpack.c.l.b16 %v1170
    %v1203 = vunpack.c.l.b16 %v1171
    %v1204 = vunpack.c.l.b16 %v1172
    %v1205 = vunpack.c.l.b16 %v1173
    %v1206 = vunpack.c.l.b16 %v1174
    %vm1207 = vcmask 1041409
    %v1208 = vsel %vm1207, %v1196, %v1195
    %vm1209 = vcmask 1042434
    %v1210 = vsel %vm1209, %v1197, %v1208
    %vm1211 = vcmask 1043459
    %v1212 = vsel %vm1211, %v1198, %v1210
    %vm1213 = vcmask 1044484
    %v1214 = vsel %vm1213, %v1199, %v1212
    %vm1215 = vcmask 1045509
    %v1216 = vsel %vm1215, %v1200, %v1214
    %vm1217 = vcmask 1046534
    %v1218 = vsel %vm1217, %v1201, %v1216
    %vm1219 = vcmask 1047559
    %v1220 = vsel %vm1219, %v1202, %v1218
    %v1221 = vsel %vm1207, %v1204, %v1203
    %v1222 = vsel %vm1209, %v1205, %v1221
    %v1223 = vsel %vm1211, %v1206, %v1222
    %v1224 = vpack.c.b16 %v1223, %v1220
    %v1233 = vunpack.c.l.b16 %v1175
    %v1234 = vunpack.c.l.b16 %v1176
    %v1235 = vunpack.c.l.b16 %v1177
    %v1236 = vunpack.c.l.b16 %v1178
    %v1237 = vunpack.c.l.b16 %v1179
    %v1238 = vunpack.c.l.b16 %v1180
    %v1239 = vunpack.c.l.b16 %v1181
    %v1240 = vunpack.c.l.b16 %v1182
    %v1241 = vpack.c.b16 %v1234, %v1233
    %v1242 = vpack.c.b16 %v1236, %v1235
    %v1243 = vpack.c.b16 %v1238, %v1237
    %v1244 = vpack.c.b16 %v1240, %v1239
    %v1250 = vsel %vm891, %v1224, 0
    %1252 = vmatpush.bf16.msra.mxu0 0
    %1253 = vmatpush.bf16.msra.mxu0 0
    %1254 = vmatpush.bf16.msra.mxu0 0
    %1255 = vmatpush.bf16.msra.mxu0 0
    %1256 = vmatpush.bf16.msra.mxu0 %v1244
    %1257 = vmatpush.bf16.msra.mxu0 %v1243
    %1258 = vmatpush.bf16.msra.mxu0 %v1242
    %1259 = vmatpush.bf16.msra.mxu0 %v1241
    %1260 = vmatmul.bf16.gmra.mxu0 %v1250
    %v1261 = vpop.f32.mrf.mxu0
    %v1262 = vadd.f32 0.0, %v1261
    %v1263 = vpop.f32.mrf.mxu0
    %v1264 = vadd.f32 0.0, %v1263
    %1265 = vdwg.mxu0
    %v1266 = vld [vmem:[%s3] sm:$0x3]
    %vm1267 = vcmask 97280
    %v1269 = vsel %vm1267, %v1266, 0
    %vm1271 = vcmask 1043456
    %v1273 = vsel %vm1271, %v1264, 0
    %1275 = vmatpush.msra.mxu0 0.0
    %1276 = vmatpush.msra.mxu0 0.0
    %1277 = vmatpush.msra.mxu0 0.0
    %1278 = vmatpush.msra.mxu0 0.0
    %1279 = vmatpush.msra.mxu0 0.0
    %1280 = vmatpush.msra.mxu0 0.0
    %1281 = vmatpush.msra.mxu0 0.0
    %1282 = vmatpush.msra.mxu0 0.0
    %1283 = vmatpush.msra.mxu0 0.0
    %1284 = vmatpush.msra.mxu0 0.0
    %1285 = vmatpush.msra.mxu0 0.0
    %1286 = vmatpush.msra.mxu0 0.0
    %1287 = vmatpush.msra.mxu0 0.0
    %1288 = vmatpush.msra.mxu0 0.0
    %1289 = vmatpush.msra.mxu0 %v1273
    %1290 = vmatpush.msra.mxu0 %v1262
    %1291 = vmatmul.f32.gmra.mxu0 %v1269
    %v1292 = vpop.f32.mrf.mxu0
    %v1293 = vadd.f32 0.0, %v1292
    %1294 = vdwg.mxu0
    %s1295 = scalar_lea.vmem %s3, 2
    %v1296 = vld [vmem:[%s1295] sm:$0x3]
    %v1298 = vsel %vm1267, %v1296, 0
    %1300 = vmatpush.msra.mxu0 0.0
    %1301 = vmatpush.msra.mxu0 0.0
    %1302 = vmatpush.msra.mxu0 0.0
    %1303 = vmatpush.msra.mxu0 0.0
    %1304 = vmatpush.msra.mxu0 0.0
    %1305 = vmatpush.msra.mxu0 0.0
    %1306 = vmatpush.msra.mxu0 0.0
    %1307 = vmatpush.msra.mxu0 0.0
    %1308 = vmatpush.msra.mxu0 0.0
    %1309 = vmatpush.msra.mxu0 0.0
    %1310 = vmatpush.msra.mxu0 0.0
    %1311 = vmatpush.msra.mxu0 0.0
    %1312 = vmatpush.msra.mxu0 0.0
    %1313 = vmatpush.msra.mxu0 0.0
    %1314 = vmatpush.msra.mxu0 %v1273
    %1315 = vmatpush.msra.mxu0 %v1262
    %1316 = vmatmul.f32.gmra.mxu0 %v1298
    %v1317 = vpop.f32.mrf.mxu0
    %v1318 = vadd.f32 0.0, %v1317
    %1319 = vdwg.mxu0
    %s1320 = scalar_lea.vmem %s3, 4
    %v1321 = vld [vmem:[%s1320] sm:$0x3]
    %v1323 = vsel %vm1267, %v1321, 0
    %1325 = vmatpush.msra.mxu0 0.0
    %1326 = vmatpush.msra.mxu0 0.0
    %1327 = vmatpush.msra.mxu0 0.0
    %1328 = vmatpush.msra.mxu0 0.0
    %1329 = vmatpush.msra.mxu0 0.0
    %1330 = vmatpush.msra.mxu0 0.0
    %1331 = vmatpush.msra.mxu0 0.0
    %1332 = vmatpush.msra.mxu0 0.0
    %1333 = vmatpush.msra.mxu0 0.0
    %1334 = vmatpush.msra.mxu0 0.0
    %1335 = vmatpush.msra.mxu0 0.0
    %1336 = vmatpush.msra.mxu0 0.0
    %1337 = vmatpush.msra.mxu0 0.0
    %1338 = vmatpush.msra.mxu0 0.0
    %1339 = vmatpush.msra.mxu0 %v1273
    %1340 = vmatpush.msra.mxu0 %v1262
    %1341 = vmatmul.f32.gmra.mxu0 %v1323
    %v1342 = vpop.f32.mrf.mxu0
    %v1343 = vadd.f32 0.0, %v1342
    %1344 = vdwg.mxu0
    %v1345 = vpack.c.bf16 %v1293, %v1293
    %v1346 = vld [vmem:[%s4] sm:$0xf]
    %v1347 = vld [vmem:[%s4 + $0x4] sm:$0xf]
    %v1348 = vld [vmem:[%s4 + $0x8] sm:$0xf]
    %v1349 = vld [vmem:[%s4 + $0xc] sm:$0xf]
    %v1350 = vld [vmem:[%s4 + $0x10] sm:$0xf]
    %v1351 = vld [vmem:[%s4 + $0x14] sm:$0xf]
    %v1352 = vld [vmem:[%s4 + $0x18] sm:$0xf]
    %v1353 = vld [vmem:[%s4 + $0x1c] sm:$0xf]
    %v1354 = vld [vmem:[%s4 + $0x20] sm:$0xf]
    %v1355 = vld [vmem:[%s4 + $0x24] sm:$0xf]
    %v1356 = vld [vmem:[%s4 + $0x28] sm:$0xf]
    %v1357 = vld [vmem:[%s4 + $0x2c] sm:$0xf]
    %v1358 = vld [vmem:[%s4 + $0x30] sm:$0xf]
    %v1359 = vld [vmem:[%s4 + $0x34] sm:$0xf]
    %v1360 = vld [vmem:[%s4 + $0x38] sm:$0xf]
    %v1361 = vld [vmem:[%s4 + $0x3c] sm:$0xf]
    %v1362 = vpack.c.bf16 %v1318, %v1318
    %v1363 = vld [vmem:[%s4 + $0x40] sm:$0xf]
    %v1364 = vld [vmem:[%s4 + $0x44] sm:$0xf]
    %v1365 = vld [vmem:[%s4 + $0x48] sm:$0xf]
    %v1366 = vld [vmem:[%s4 + $0x4c] sm:$0xf]
    %v1367 = vld [vmem:[%s4 + $0x50] sm:$0xf]
    %v1368 = vld [vmem:[%s4 + $0x54] sm:$0xf]
    %v1369 = vld [vmem:[%s4 + $0x58] sm:$0xf]
    %v1370 = vld [vmem:[%s4 + $0x5c] sm:$0xf]
    %v1371 = vld [vmem:[%s4 + $0x60] sm:$0xf]
    %v1372 = vld [vmem:[%s4 + $0x64] sm:$0xf]
    %v1373 = vld [vmem:[%s4 + $0x68] sm:$0xf]
    %v1374 = vld [vmem:[%s4 + $0x6c] sm:$0xf]
    %v1375 = vld [vmem:[%s4 + $0x70] sm:$0xf]
    %v1376 = vld [vmem:[%s4 + $0x74] sm:$0xf]
    %v1377 = vld [vmem:[%s4 + $0x78] sm:$0xf]
    %v1378 = vld [vmem:[%s4 + $0x7c] sm:$0xf]
    %v1395 = vunpack.c.l.b16 %v1363
    %v1396 = vunpack.c.l.b16 %v1364
    %v1397 = vunpack.c.l.b16 %v1365
    %v1398 = vunpack.c.l.b16 %v1366
    %v1399 = vunpack.c.l.b16 %v1367
    %v1400 = vunpack.c.l.b16 %v1368
    %v1401 = vunpack.c.l.b16 %v1369
    %v1402 = vunpack.c.l.b16 %v1370
    %v1403 = vunpack.c.l.b16 %v1371
    %v1404 = vunpack.c.l.b16 %v1372
    %v1405 = vunpack.c.l.b16 %v1373
    %v1406 = vunpack.c.l.b16 %v1374
    %v1407 = vunpack.c.l.b16 %v1375
    %v1408 = vunpack.c.l.b16 %v1376
    %v1409 = vunpack.c.l.b16 %v1377
    %v1410 = vunpack.c.l.b16 %v1378
    %v1411 = vpack.c.b16 %v1396, %v1395
    %v1412 = vpack.c.b16 %v1398, %v1397
    %v1413 = vpack.c.b16 %v1400, %v1399
    %v1414 = vpack.c.b16 %v1402, %v1401
    %v1415 = vpack.c.b16 %v1404, %v1403
    %v1416 = vpack.c.b16 %v1406, %v1405
    %v1417 = vpack.c.b16 %v1408, %v1407
    %v1418 = vpack.c.b16 %v1410, %v1409
    %1427 = vmatpush.bf16.msra.mxu0 %v1418
    %1428 = vmatpush.bf16.msra.mxu0 %v1417
    %1429 = vmatpush.bf16.msra.mxu0 %v1416
    %1430 = vmatpush.bf16.msra.mxu0 %v1415
    %1431 = vmatpush.bf16.msra.mxu0 %v1414
    %1432 = vmatpush.bf16.msra.mxu0 %v1413
    %1433 = vmatpush.bf16.msra.mxu0 %v1412
    %1434 = vmatpush.bf16.msra.mxu0 %v1411
    %1435 = vmatmul.bf16.gmra.mxu0 %v1362
    %v1436 = vpop.f32.mrf.mxu0
    %v1437 = vadd.f32 0.0, %v1436
    %v1438 = vpop.f32.mrf.mxu0
    %1439 = vdwg.mxu0
    %v1456 = vunpack.c.l.b16 %v1346
    %v1457 = vunpack.c.l.b16 %v1347
    %v1458 = vunpack.c.l.b16 %v1348
    %v1459 = vunpack.c.l.b16 %v1349
    %v1460 = vunpack.c.l.b16 %v1350
    %v1461 = vunpack.c.l.b16 %v1351
    %v1462 = vunpack.c.l.b16 %v1352
    %v1463 = vunpack.c.l.b16 %v1353
    %v1464 = vunpack.c.l.b16 %v1354
    %v1465 = vunpack.c.l.b16 %v1355
    %v1466 = vunpack.c.l.b16 %v1356
    %v1467 = vunpack.c.l.b16 %v1357
    %v1468 = vunpack.c.l.b16 %v1358
    %v1469 = vunpack.c.l.b16 %v1359
    %v1470 = vunpack.c.l.b16 %v1360
    %v1471 = vunpack.c.l.b16 %v1361
    %v1472 = vpack.c.b16 %v1457, %v1456
    %v1473 = vpack.c.b16 %v1459, %v1458
    %v1474 = vpack.c.b16 %v1461, %v1460
    %v1475 = vpack.c.b16 %v1463, %v1462
    %v1476 = vpack.c.b16 %v1465, %v1464
    %v1477 = vpack.c.b16 %v1467, %v1466
    %v1478 = vpack.c.b16 %v1469, %v1468
    %v1479 = vpack.c.b16 %v1471, %v1470
    %1488 = vmatpush.bf16.msra.mxu0 %v1479
    %1489 = vmatpush.bf16.msra.mxu0 %v1478
    %1490 = vmatpush.bf16.msra.mxu0 %v1477
    %1491 = vmatpush.bf16.msra.mxu0 %v1476
    %1492 = vmatpush.bf16.msra.mxu0 %v1475
    %1493 = vmatpush.bf16.msra.mxu0 %v1474
    %1494 = vmatpush.bf16.msra.mxu0 %v1473
    %1495 = vmatpush.bf16.msra.mxu0 %v1472
    %1496 = vmatmul.bf16.gmra.mxu0 %v1345
    %v1497 = vpop.f32.mrf.mxu0
    %v1498 = vadd.f32 %v1437, %v1497
    %v1499 = vpop.f32.mrf.mxu0
    %1500 = vdwg.mxu0
    %v1501 = vpack.c.bf16 %v1343, %v1343
    %v1502 = vld [vmem:[%s4 + $0x80] sm:$0xf]
    %v1503 = vld [vmem:[%s4 + $0x84] sm:$0xf]
    %v1504 = vld [vmem:[%s4 + $0x88] sm:$0xf]
    %v1505 = vld [vmem:[%s4 + $0x8c] sm:$0xf]
    %v1506 = vld [vmem:[%s4 + $0x90] sm:$0xf]
    %v1507 = vld [vmem:[%s4 + $0x94] sm:$0xf]
    %v1508 = vld [vmem:[%s4 + $0x98] sm:$0xf]
    %v1509 = vld [vmem:[%s4 + $0x9c] sm:$0xf]
    %v1510 = vld [vmem:[%s4 + $0xa0] sm:$0xf]
    %v1511 = vld [vmem:[%s4 + $0xa4] sm:$0xf]
    %v1512 = vld [vmem:[%s4 + $0xa8] sm:$0xf]
    %v1513 = vld [vmem:[%s4 + $0xac] sm:$0xf]
    %v1514 = vld [vmem:[%s4 + $0xb0] sm:$0xf]
    %v1515 = vld [vmem:[%s4 + $0xb4] sm:$0xf]
    %v1516 = vld [vmem:[%s4 + $0xb8] sm:$0xf]
    %v1517 = vld [vmem:[%s4 + $0xbc] sm:$0xf]
    %v1534 = vunpack.c.l.b16 %v1502
    %v1535 = vunpack.c.l.b16 %v1503
    %v1536 = vunpack.c.l.b16 %v1504
    %v1537 = vunpack.c.l.b16 %v1505
    %v1538 = vunpack.c.l.b16 %v1506
    %v1539 = vunpack.c.l.b16 %v1507
    %v1540 = vunpack.c.l.b16 %v1508
    %v1541 = vunpack.c.l.b16 %v1509
    %v1542 = vunpack.c.l.b16 %v1510
    %v1543 = vunpack.c.l.b16 %v1511
    %v1544 = vunpack.c.l.b16 %v1512
    %v1545 = vunpack.c.l.b16 %v1513
    %v1546 = vunpack.c.l.b16 %v1514
    %v1547 = vunpack.c.l.b16 %v1515
    %v1548 = vunpack.c.l.b16 %v1516
    %v1549 = vunpack.c.l.b16 %v1517
    %v1550 = vpack.c.b16 %v1535, %v1534
    %v1551 = vpack.c.b16 %v1537, %v1536
    %v1552 = vpack.c.b16 %v1539, %v1538
    %v1553 = vpack.c.b16 %v1541, %v1540
    %v1554 = vpack.c.b16 %v1543, %v1542
    %v1555 = vpack.c.b16 %v1545, %v1544
    %v1556 = vpack.c.b16 %v1547, %v1546
    %v1557 = vpack.c.b16 %v1549, %v1548
    %1566 = vmatpush.bf16.msra.mxu0 %v1557
    %1567 = vmatpush.bf16.msra.mxu0 %v1556
    %1568 = vmatpush.bf16.msra.mxu0 %v1555
    %1569 = vmatpush.bf16.msra.mxu0 %v1554
    %1570 = vmatpush.bf16.msra.mxu0 %v1553
    %1571 = vmatpush.bf16.msra.mxu0 %v1552
    %1572 = vmatpush.bf16.msra.mxu0 %v1551
    %1573 = vmatpush.bf16.msra.mxu0 %v1550
    %1574 = vmatmul.bf16.gmra.mxu0 %v1501
    %v1575 = vpop.f32.mrf.mxu0
    %v1576 = vadd.f32 0.0, %v1575
    %v1577 = vpop.f32.mrf.mxu0
    %1578 = vdwg.mxu0
    %v1579 = vadd.f32 %v1498, %v1576
    %v1580 = vld [vmem:[%s5] sm:$0x1]
    %v1582 = vperm.slane %v1580, 0
    %v1584 = vadd.f32 %v1579, %v1582
    %v1585 = vmax.f32 %v1584, 0.0
    %v1586 = vpack.c.bf16 %v1585, %v1585
    %v1587 = vld [vmem:[%s6] sm:$0xf]
    %v1588 = vld [vmem:[%s6 + $0x4] sm:$0xf]
    %v1589 = vld [vmem:[%s6 + $0x8] sm:$0xf]
    %v1590 = vld [vmem:[%s6 + $0xc] sm:$0xf]
    %v1591 = vld [vmem:[%s6 + $0x10] sm:$0xf]
    %v1592 = vld [vmem:[%s6 + $0x14] sm:$0xf]
    %v1593 = vld [vmem:[%s6 + $0x18] sm:$0xf]
    %v1594 = vld [vmem:[%s6 + $0x1c] sm:$0xf]
    %v1595 = vld [vmem:[%s7] sm:$0x1]
    %v1597 = vperm.slane %v1595, 0
    %v1607 = vunpack.c.l.b16 %v1587
    %v1608 = vunpack.c.l.b16 %v1588
    %v1609 = vunpack.c.l.b16 %v1589
    %v1610 = vunpack.c.l.b16 %v1590
    %v1611 = vunpack.c.l.b16 %v1591
    %v1612 = vunpack.c.l.b16 %v1592
    %v1613 = vunpack.c.l.b16 %v1593
    %v1614 = vunpack.c.l.b16 %v1594
    %v1615 = vpack.c.b16 %v1608, %v1607
    %v1616 = vpack.c.b16 %v1610, %v1609
    %v1617 = vpack.c.b16 %v1612, %v1611
    %v1618 = vpack.c.b16 %v1614, %v1613
    %v1624 = vsel %vm891, %v1586, 0
    %1626 = vmatpush.bf16.msra.mxu0 0
    %1627 = vmatpush.bf16.msra.mxu0 0
    %1628 = vmatpush.bf16.msra.mxu0 0
    %1629 = vmatpush.bf16.msra.mxu0 0
    %1630 = vmatpush.bf16.msra.mxu0 %v1618
    %1631 = vmatpush.bf16.msra.mxu0 %v1617
    %1632 = vmatpush.bf16.msra.mxu0 %v1616
    %1633 = vmatpush.bf16.msra.mxu0 %v1615
    %1634 = vmatmul.bf16.gmra.mxu0 %v1624
    %v1635 = vpop.f32.mrf.mxu0
    %v1636 = vadd.f32 %v1597, %v1635
    %v1637 = vpop.f32.mrf.mxu0
    %1638 = vdwg.mxu0
    %vm1639 = vcmask 25600
    %1640 = vst.msk [vmem:[#allocation2] sm:$0x3] %vm1639, %v1636
    // Predicated region
    $region34: #{two_sites_forward.1} parent=1 // pred_check
      _
    $region35: #{two_sites_forward.1} parent=1 // pred_check_branch
      %1642 = sbr.rel (0) target = $region37
    $region36: #{two_sites_forward.1} parent=1 // pred_region
      %1644 = vsyncadd [#allocation3], 0
      %s1646 = sshll.u32 [#allocation2], 4
      %s1647 = int_to_ptr.vmem [resolvable:$true] %s1646
      %s1648 = sshll.u32 %s8, 4
      %s1649 = int_to_ptr.hbm [resolvable:$true] %s1648
      %1651 = dma.vmem_to_hbm [thread:$0]  %s1647, 32, %s1649, [#allocation3]
    $region37: #{two_sites_forward.1} parent=1 // pred_fallthru
      _
    // Predicated region
    $region38: #{two_sites_forward.1} parent=1 // pred_check
      _
    $region39: #{two_sites_forward.1} parent=1 // pred_check_branch
      %1653 = sbr.rel (0) target = $region41
    $region40: #{two_sites_forward.1} parent=1 // pred_region
      %1655 = dma.done [#allocation3], 32
    $region41: #{two_sites_forward.1} parent=1 // pred_fallthru
      _
    %1656 = vsyncpa [#allocation3], 1

</llo_original>
